<compile_context>
chip_gen: v6e
topology: v6e:2x2x1
jax: 0.10.0
libtpu: 0.0.40
codegen_flags: <defaults>
</compile_context>

<pallas_src>
import math
from functools import partial

import numpy as np
import jax
import jax.numpy as jnp
from jax.experimental import pallas as pl
from jax.experimental.pallas import tpu as pltpu

BN_EPS = 1e-5
HIGHEST = jax.lax.Precision.HIGHEST   # reference only; kernels use default MXU precision

_VMEM_LIMIT = 32 * 1024 * 1024        # explicit scoped-VMEM cap (safe on v5e/v6e/v7x)
_ROW_BLOCK = 512                      # row tile for full-resolution matmuls


def _round_up(x, m):
    return ((x + m - 1) // m) * m


def _pick_row_tile(total, cap=_ROW_BLOCK):
    """Largest tile <= cap that divides `total` and is a multiple of 8 (else `total`)."""
    for t in (cap, 256, 128, 64, 32, 16, 8):
        if t <= cap and total % t == 0:
            return t
    return total


# ------------------------------------------------------------------- kernels --

def _conv1x1_kernel(x_ref, w_ref, b_ref, o_ref):
    # relu(x @ w + b): 1x1 conv with eval-mode BatchNorm folded into (w, b).
    y = jnp.dot(x_ref[...], w_ref[...], preferred_element_type=jnp.float32)
    o_ref[...] = jnp.maximum(y + b_ref[...], 0.0).astype(o_ref.dtype)


def conv1x1_bn_relu(x2d, w, bias, *, row_block=_ROW_BLOCK):
    """x2d: (P, Cin) pixels x channels, w: (Cin, Cout) BN-folded, bias: (Cout,)."""
    P, Cin = x2d.shape
    Cout = w.shape[1]
    rb = min(row_block, _round_up(P, 8))
    Pp = _round_up(P, rb)                 # pad rows instead of collapsing to one block
    xp = x2d if Pp == P else jnp.pad(x2d, ((0, Pp - P), (0, 0)))
    out = pl.pallas_call(
        _conv1x1_kernel,
        out_shape=jax.ShapeDtypeStruct((Pp, Cout), jnp.float32),
        grid=(Pp // rb,),
        in_specs=[
            pl.BlockSpec((rb, Cin), lambda i: (i, 0)),
            pl.BlockSpec((Cin, Cout), lambda i: (0, 0)),
            pl.BlockSpec((1, Cout), lambda i: (0, 0)),
        ],
        out_specs=pl.BlockSpec((rb, Cout), lambda i: (i, 0)),
        compiler_params=pltpu.CompilerParams(
            dimension_semantics=("parallel",),
            vmem_limit_bytes=_VMEM_LIMIT),
    )(xp, w, bias.reshape(1, -1))
    return out if Pp == P else out[:P]


def _branch_kernel(y_ref, a_ref, wf_ref, bf_ref, w2_ref, g_ref):
    # One SPP branch at pooled resolution (per batch element, per bin).
    pooled = jnp.dot(a_ref[0], y_ref[0], preferred_element_type=jnp.float32)      # (Gmax, C)
    f = jnp.maximum(
        jnp.dot(pooled, wf_ref[0], preferred_element_type=jnp.float32) + bf_ref[0], 0.0)
    g = jnp.dot(f, w2_ref[0], preferred_element_type=jnp.float32)                 # (Gmax, rd_out)
    g_ref[...] = g[None, None].astype(g_ref.dtype)


def _fuse_upsample_conv2_kernel(y_ref, w20_ref, bcat_ref, g_ref, b2_ref, o_ref):
    # out = relu( y @ W2'[:C]  +  Bcat @ G  +  b2 )
    # Bcat @ G = sum over bins of bilinear-upsample(f_i @ W2'_i): conv2 commuted through
    # the upsampling, so the concat of the PyTorch module is never materialized.
    acc = jnp.dot(y_ref[0], w20_ref[...], preferred_element_type=jnp.float32)
    acc = acc + jnp.dot(bcat_ref[...], g_ref[0], preferred_element_type=jnp.float32)
    o_ref[...] = jnp.maximum(acc + b2_ref[...], 0.0)[None].astype(o_ref.dtype)


# ------------------------------------------------ pooling / interp operators --

def adaptive_pool_matrix(in_size, out_size):
    """(out_size, in_size) matrix == F.adaptive_avg_pool along one axis."""
    m = np.zeros((out_size, in_size), dtype=np.float32)
    for i in range(out_size):
        start = (i * in_size) // out_size
        end = -((-(i + 1) * in_size) // out_size)   # ceil((i+1)*in/out)
        m[i, start:end] = 1.0 / (end - start)
    return m


def bilinear_matrix(out_size, in_size):
    """(out_size, in_size) matrix == bilinear interp along one axis, align_corners=True."""
    m = np.zeros((out_size, in_size), dtype=np.float32)
    if in_size == 1:
        m[:, 0] = 1.0
        return m
    if out_size == 1:
        m[0, 0] = 1.0
        return m
    scale = (in_size - 1) / (out_size - 1)
    for i in range(out_size):
        src = i * scale
        i0 = min(int(math.floor(src)), in_size - 1)
        i1 = min(i0 + 1, in_size - 1)
        w1 = src - i0
        m[i, i0] += 1.0 - w1
        m[i, i1] += w1
    return m


# ------------------------------------------------------------------- forward --

def spp_forward(x, params, bins):
    """Pallas SPP forward. x: (N, C, H, W) float32; params: packed, BN-folded."""
    N, C, H, W = x.shape
    HW = H * W
    ar = W / H
    nb = len(bins)
    rd = params["wf"].shape[-1]
    rd_out = params["w20"].shape[-1]

    # Static per-bin spatial operators (trace-time constants, built with numpy).
    grid_sizes = [(b, max(1, round(ar * b))) for b in bins]
    gmax = max(gh * gw for gh, gw in grid_sizes)
    A_pad = np.zeros((nb, gmax, HW), np.float32)     # Kronecker adaptive-avg-pool (padded rows)
    B_cat = np.zeros((HW, nb * gmax), np.float32)    # Kronecker bilinear upsample (padded cols = 0)
    for i, (gh, gw) in enumerate(grid_sizes):
        g = gh * gw
        A_pad[i, :g, :] = np.kron(adaptive_pool_matrix(H, gh), adaptive_pool_matrix(W, gw))
        B_cat[:, i * gmax:i * gmax + g] = np.kron(bilinear_matrix(H, gh), bilinear_matrix(W, gw))
    A_pad = jnp.asarray(A_pad)
    B_cat = jnp.asarray(B_cat)

    # Single layout change at entry: NCHW -> (pixels, channels).
    x_pix = x.transpose(0, 2, 3, 1).reshape(N * HW, C)

    # conv1: 1x1 conv + folded BN + ReLU at full resolution (row-tiled matmul).
    y = conv1x1_bn_relu(x_pix, params["w1"], params["b1"]).reshape(N, HW, C)

    # All SPP branches in one fused pallas_call over grid (batch, bin).
    # TODO(synk): for very large H*W the y block (HW x C) should be split into HW chunks
    # with an accumulated pooling contraction to stay well inside v7x's 64 MiB VMEM.
    G = pl.pallas_call(
        _branch_kernel,
        out_shape=jax.ShapeDtypeStruct((N, nb, gmax, rd_out), jnp.float32),
        grid=(N, nb),
        in_specs=[
            pl.BlockSpec((1, HW, C), lambda n, b: (n, 0, 0)),        # y (re-used across bins)
            pl.BlockSpec((1, gmax, HW), lambda n, b: (b, 0, 0)),     # pooling operator
            pl.BlockSpec((1, C, rd), lambda n, b: (b, 0, 0)),        # branch conv weight (BN folded)
            pl.BlockSpec((1, 1, rd), lambda n, b: (b, 0, 0)),        # branch conv bias
            pl.BlockSpec((1, rd, rd_out), lambda n, b: (b, 0, 0)),   # conv2 slice for this branch
        ],
        out_specs=pl.BlockSpec((1, 1, gmax, rd_out), lambda n, b: (n, b, 0, 0)),
        compiler_params=pltpu.CompilerParams(
            dimension_semantics=("parallel", "arbitrary"),
            vmem_limit_bytes=_VMEM_LIMIT),
    )(y, A_pad, params["wf"], params["bf"], params["w2b"])
    G = G.reshape(N, nb * gmax, rd_out)

    # Fused upsample + (implicit concat) + conv2 + BN + ReLU at full resolution.
    thw = _pick_row_tile(HW)
    out_pix = pl.pallas_call(
        _fuse_upsample_conv2_kernel,
        out_shape=jax.ShapeDtypeStruct((N, HW, rd_out), jnp.float32),
        grid=(N, HW // thw),
        in_specs=[
            pl.BlockSpec((1, thw, C), lambda n, t: (n, t, 0)),             # y row tile
            pl.BlockSpec((C, rd_out), lambda n, t: (0, 0)),                # conv2 slice for y
            pl.BlockSpec((thw, nb * gmax), lambda n, t: (t, 0)),           # upsample operator rows
            pl.BlockSpec((1, nb * gmax, rd_out), lambda n, t: (n, 0, 0)),  # per-bin partial results
            pl.BlockSpec((1, rd_out), lambda n, t: (0, 0)),                # conv2 bias
        ],
        out_specs=pl.BlockSpec((1, thw, rd_out), lambda n, t: (n, t, 0)),
        compiler_params=pltpu.CompilerParams(
            dimension_semantics=("parallel", "parallel"),
            vmem_limit_bytes=_VMEM_LIMIT),
    )(y, params["w20"], B_cat, G, params["b2"])

    # Single layout change at exit: (pixels, channels) -> NCHW.
    return out_pix.reshape(N, H, W, rd_out).transpose(0, 3, 1, 2)


# ------------------------------------------------------------------- params --

def _fold_conv_bn(key, cin, cout):
    """Random 1x1 conv (no bias) + eval-mode BatchNorm, folded to (w', b') (exact algebra)."""
    k1, k2, k3, k4, k5 = jax.random.split(key, 5)
    w = jax.random.normal(k1, (cin, cout), jnp.float32) * 0.1
    gamma = jax.random.uniform(k2, (cout,), jnp.float32, 0.5, 1.5)
    beta = jax.random.normal(k3, (cout,), jnp.float32) * 0.1
    mean = jax.random.normal(k4, (cout,), jnp.float32) * 0.1
    var = jax.random.uniform(k5, (cout,), jnp.float32, 0.5, 1.5)
    scale = gamma / jnp.sqrt(var + BN_EPS)
    return w * scale[None, :], beta - mean * scale


def init_spp_params(key, in_dim, reduction_dim, bins):
    """BN-folded parameters for SPP (conv1, per-bin feature convs, conv2)."""
    nb = len(bins)
    keys = jax.random.split(key, nb + 2)
    w1, b1 = _fold_conv_bn(keys[0], in_dim, in_dim)
    folded = [_fold_conv_bn(keys[1 + i], in_dim, reduction_dim) for i in range(nb)]
    wf, bf = [list(t) for t in zip(*folded)]
    cat_dim = in_dim + reduction_dim * nb
    w2, b2 = _fold_conv_bn(keys[-1], cat_dim, reduction_dim)
    return dict(w1=w1, b1=b1, wf=wf, bf=bf, w2=w2, b2=b2)


def pack_spp_params(p, in_dim, reduction_dim, bins):
    """Stack per-bin weights and split conv2 per concat segment for the fused kernels."""
    nb = len(bins)
    rd = reduction_dim
    return dict(
        w1=p["w1"], b1=p["b1"],
        wf=jnp.stack(p["wf"]),                                          # (nb, C, rd)
        bf=jnp.stack([b.reshape(1, -1) for b in p["bf"]]),              # (nb, 1, rd)
        w20=p["w2"][:in_dim],                                           # (C, rd_out)
        w2b=jnp.stack([p["w2"][in_dim + i * rd: in_dim + (i + 1) * rd]  # (nb, rd, rd_out)
                       for i in range(nb)]),
        b2=p["b2"].reshape(1, -1),                                      # (1, rd_out)
    )


# ---------------------------------------------------------------- reference --

def spp_ref(x, p, bins):
    """Pure-JAX reference with the original module structure (pool->conv->upsample->cat->conv2)."""
    N, C, H, W = x.shape
    ar = W / H

    def cbr(z, w, b):   # 1x1 conv + folded BN + ReLU, NCHW
        y = jnp.einsum("nchw,cd->ndhw", z, w, precision=HIGHEST)
        return jnp.maximum(y + b[None, :, None, None], 0.0)

    y = cbr(x, p["w1"], p["b1"])
    outs = [y]
    for i, b in enumerate(bins):
        gh, gw = b, max(1, round(ar * b))
        A_h = jnp.asarray(adaptive_pool_matrix(H, gh))
        A_w = jnp.asarray(adaptive_pool_matrix(W, gw))
        pooled = jnp.einsum("ih,nchw->nciw", A_h, y, precision=HIGHEST)
        pooled = jnp.einsum("jw,nciw->ncij", A_w, pooled, precision=HIGHEST)
        f = cbr(pooled, p["wf"][i], p["bf"][i])
        B_h = jnp.asarray(bilinear_matrix(H, gh))
        B_w = jnp.asarray(bilinear_matrix(W, gw))
        u = jnp.einsum("hi,ncij->nchj", B_h, f, precision=HIGHEST)
        u = jnp.einsum("wj,nchj->nchw", B_w, u, precision=HIGHEST)
        outs.append(u)
    cat = jnp.concatenate(outs, axis=1)
    return cbr(cat, p["w2"], p["b2"])


# -------------------------------------------------------------------- main --

if __name__ == "__main__":
    # Small shapes consistent with the module (PyTorch default: in_dim=512, rd=128, bins 6/3/2/1).
    N, in_dim, H, W = 2, 32, 16, 16
    reduction_dim = 8
    bins = (6, 3, 2, 1)

    root = jax.random.PRNGKey(0)
    kx, kp = jax.random.split(root)
    x = jax.random.normal(kx, (N, in_dim, H, W), jnp.float32)
    raw = init_spp_params(kp, in_dim, reduction_dim, bins)

    # Quantize test vectors to bf16-representable float32 so the correctness check stays
    # tight even when the MXU runs at default (single-pass bf16) precision.
    q = lambda a: jnp.asarray(a, jnp.bfloat16).astype(jnp.float32)
    x = q(x)
    raw = jax.tree_util.tree_map(q, raw)

    params = pack_spp_params(raw, in_dim, reduction_dim, bins)

    spp_fn = jax.jit(partial(spp_forward, bins=bins))
    out = jax.block_until_ready(spp_fn(x, params))
    assert out.shape == (N, reduction_dim, H, W), out.shape

    ref = jax.block_until_ready(spp_ref(x, raw, bins))
    # Tolerance sized for default MXU precision (bf16 passes) vs. an f32 HIGHEST reference;
    # with bf16-exact parameters the observed error is well below this bound.
    np.testing.assert_allclose(np.asarray(out), np.asarray(ref), rtol=2e-2, atol=2e-2)

    print("KERNEL_OK")
</pallas_src>

<mosaic_0001>
module attributes {stable_mosaic.version = 11 : i64} {
  func.func @_branch_kernel(%arg0: i32, %arg1: i32, %arg2: memref<1x256x32xf32, #tpu.memory_space<vmem>>, %arg3: memref<1x36x256xf32, #tpu.memory_space<vmem>>, %arg4: memref<1x32x8xf32, #tpu.memory_space<vmem>>, %arg5: memref<1x1x8xf32, #tpu.memory_space<vmem>>, %arg6: memref<1x8x8xf32, #tpu.memory_space<vmem>>, %arg7: memref<1x1x36x8xf32, #tpu.memory_space<vmem>>) attributes {dimension_semantics = [#tpu.dimension_semantics<parallel>, #tpu.dimension_semantics<arbitrary>], iteration_bounds = array<i64: 2, 4>, scalar_prefetch = 0 : i64, scratch_operands = 0 : i64, tpu.core_type = #tpu.core_type<tc>, window_params = [{transform_indices = @transform_0, window_bounds = array<i64: 1, 256, 32>}, {transform_indices = @transform_1, window_bounds = array<i64: 1, 36, 256>}, {transform_indices = @transform_2, window_bounds = array<i64: 1, 32, 8>}, {transform_indices = @transform_3, window_bounds = array<i64: 1, 1, 8>}, {transform_indices = @transform_4, window_bounds = array<i64: 1, 8, 8>}, {transform_indices = @transform_5, window_bounds = array<i64: 1, 1, 36, 8>}]} {
    %c0 = arith.constant 0 : index
    %c0_0 = arith.constant 0 : index
    %c0_1 = arith.constant 0 : index
    %0 = vector.load %arg3[%c0, %c0_0, %c0_1] : memref<1x36x256xf32, #tpu.memory_space<vmem>>, vector<1x36x256xf32>
    %1 = vector.shape_cast %0 : vector<1x36x256xf32> to vector<36x256xf32>
    %c0_2 = arith.constant 0 : index
    %c0_3 = arith.constant 0 : index
    %c0_4 = arith.constant 0 : index
    %2 = vector.load %arg2[%c0_2, %c0_3, %c0_4] : memref<1x256x32xf32, #tpu.memory_space<vmem>>, vector<1x256x32xf32>
    %3 = vector.shape_cast %2 : vector<1x256x32xf32> to vector<256x32xf32>
    %cst = arith.constant dense<0.000000e+00> : vector<36x32xf32>
    %4 = tpu.matmul %1, %3, %cst {dimension_numbers = #tpu.dot_dimension_numbers<[1], [0], [0], [1], [0, 0, 1, 1], [], []>} : vector<36x256xf32>, vector<256x32xf32>, vector<36x32xf32> -> vector<36x32xf32>
    %c0_5 = arith.constant 0 : index
    %c0_6 = arith.constant 0 : index
    %c0_7 = arith.constant 0 : index
    %5 = vector.load %arg4[%c0_5, %c0_6, %c0_7] : memref<1x32x8xf32, #tpu.memory_space<vmem>>, vector<1x32x8xf32>
    %6 = vector.shape_cast %5 : vector<1x32x8xf32> to vector<32x8xf32>
    %cst_8 = arith.constant dense<0.000000e+00> : vector<36x8xf32>
    %7 = tpu.matmul %4, %6, %cst_8 {dimension_numbers = #tpu.dot_dimension_numbers<[1], [0], [0], [1], [0, 0, 1, 1], [], []>} : vector<36x32xf32>, vector<32x8xf32>, vector<36x8xf32> -> vector<36x8xf32>
    %c0_9 = arith.constant 0 : index
    %c0_10 = arith.constant 0 : index
    %c0_11 = arith.constant 0 : index
    %8 = vector.load %arg5[%c0_9, %c0_10, %c0_11] : memref<1x1x8xf32, #tpu.memory_space<vmem>>, vector<1x1x8xf32>
    %9 = vector.shape_cast %8 : vector<1x1x8xf32> to vector<1x8xf32>
    %10 = vector.broadcast %9 : vector<1x8xf32> to vector<36x8xf32>
    %11 = arith.addf %7, %10 : vector<36x8xf32>
    %cst_12 = arith.constant 0.000000e+00 : f32
    %12 = vector.broadcast %cst_12 : f32 to vector<36x8xf32>
    %13 = arith.maximumf %11, %12 : vector<36x8xf32>
    %c0_13 = arith.constant 0 : index
    %c0_14 = arith.constant 0 : index
    %c0_15 = arith.constant 0 : index
    %14 = vector.load %arg6[%c0_13, %c0_14, %c0_15] : memref<1x8x8xf32, #tpu.memory_space<vmem>>, vector<1x8x8xf32>
    %15 = vector.shape_cast %14 : vector<1x8x8xf32> to vector<8x8xf32>
    %cst_16 = arith.constant dense<0.000000e+00> : vector<36x8xf32>
    %16 = tpu.matmul %13, %15, %cst_16 {dimension_numbers = #tpu.dot_dimension_numbers<[1], [0], [0], [1], [0, 0, 1, 1], [], []>} : vector<36x8xf32>, vector<8x8xf32>, vector<36x8xf32> -> vector<36x8xf32>
    %17 = vector.shape_cast %16 : vector<36x8xf32> to vector<1x1x36x8xf32>
    %c0_17 = arith.constant 0 : index
    %c0_18 = arith.constant 0 : index
    %c0_19 = arith.constant 0 : index
    %c0_20 = arith.constant 0 : index
    %18 = vector.load %arg7[%c0_17, %c0_18, %c0_19, %c0_20] : memref<1x1x36x8xf32, #tpu.memory_space<vmem>>, vector<1x1x36x8xf32>
    tpu.vector_store %arg7[%c0_17, %c0_18, %c0_19, %c0_20], %17 {strides = array<i32>} : memref<1x1x36x8xf32, #tpu.memory_space<vmem>>, vector<1x1x36x8xf32>,
    return
  }
  func.func @transform_0(%arg0: i32, %arg1: i32) -> (i32, i32, i32) {
    %c0_i32 = arith.constant 0 : i32
    %c0_i32_0 = arith.constant 0 : i32
    %c0_i32_1 = arith.constant 0 : i32
    return %arg0, %c0_i32, %c0_i32_0 : i32, i32, i32
  }
  func.func @transform_1(%arg0: i32, %arg1: i32) -> (i32, i32, i32) {
    %c0_i32 = arith.constant 0 : i32
    %c0_i32_0 = arith.constant 0 : i32
    %c0_i32_1 = arith.constant 0 : i32
    return %arg1, %c0_i32, %c0_i32_0 : i32, i32, i32
  }
  func.func @transform_2(%arg0: i32, %arg1: i32) -> (i32, i32, i32) {
    %c0_i32 = arith.constant 0 : i32
    %c0_i32_0 = arith.constant 0 : i32
    %c0_i32_1 = arith.constant 0 : i32
    return %arg1, %c0_i32, %c0_i32_0 : i32, i32, i32
  }
  func.func @transform_3(%arg0: i32, %arg1: i32) -> (i32, i32, i32) {
    %c0_i32 = arith.constant 0 : i32
    %c0_i32_0 = arith.constant 0 : i32
    %c0_i32_1 = arith.constant 0 : i32
    return %arg1, %c0_i32, %c0_i32_0 : i32, i32, i32
  }
  func.func @transform_4(%arg0: i32, %arg1: i32) -> (i32, i32, i32) {
    %c0_i32 = arith.constant 0 : i32
    %c0_i32_0 = arith.constant 0 : i32
    %c0_i32_1 = arith.constant 0 : i32
    return %arg1, %c0_i32, %c0_i32_0 : i32, i32, i32
  }
  func.func @transform_5(%arg0: i32, %arg1: i32) -> (i32, i32, i32, i32) {
    %c0_i32 = arith.constant 0 : i32
    %c0_i32_0 = arith.constant 0 : i32
    %c0_i32_1 = arith.constant 0 : i32
    return %arg0, %arg1, %c0_i32, %c0_i32_0 : i32, i32, i32, i32
  }
}

module attributes {stable_mosaic.version = 11 : i64} {
  func.func @_conv1x1_kernel(%arg0: i32, %arg1: memref<512x32xf32, #tpu.memory_space<vmem>>, %arg2: memref<32x32xf32, #tpu.memory_space<vmem>>, %arg3: memref<1x32xf32, #tpu.memory_space<vmem>>, %arg4: memref<512x32xf32, #tpu.memory_space<vmem>>) attributes {dimension_semantics = [#tpu.dimension_semantics<parallel>], iteration_bounds = array<i64: 1>, scalar_prefetch = 0 : i64, scratch_operands = 0 : i64, tpu.core_type = #tpu.core_type<tc>, window_params = [{transform_indices = @transform_0, window_bounds = array<i64: 512, 32>}, {pipeline_mode = #tpu.pipeline_mode<synchronous>, transform_indices = @transform_1, window_bounds = array<i64: 32, 32>}, {pipeline_mode = #tpu.pipeline_mode<synchronous>, transform_indices = @transform_2, window_bounds = array<i64: 1, 32>}, {transform_indices = @transform_3, window_bounds = array<i64: 512, 32>}]} {
    %c0 = arith.constant 0 : index
    %c0_0 = arith.constant 0 : index
    %0 = vector.load %arg1[%c0, %c0_0] : memref<512x32xf32, #tpu.memory_space<vmem>>, vector<512x32xf32>
    %c0_1 = arith.constant 0 : index
    %c0_2 = arith.constant 0 : index
    %1 = vector.load %arg2[%c0_1, %c0_2] : memref<32x32xf32, #tpu.memory_space<vmem>>, vector<32x32xf32>
    %cst = arith.constant dense<0.000000e+00> : vector<512x32xf32>
    %2 = tpu.matmul %0, %1, %cst {dimension_numbers = #tpu.dot_dimension_numbers<[1], [0], [0], [1], [0, 0, 1, 1], [], []>} : vector<512x32xf32>, vector<32x32xf32>, vector<512x32xf32> -> vector<512x32xf32>
    %c0_3 = arith.constant 0 : index
    %c0_4 = arith.constant 0 : index
    %3 = vector.load %arg3[%c0_3, %c0_4] : memref<1x32xf32, #tpu.memory_space<vmem>>, vector<1x32xf32>
    %4 = vector.broadcast %3 : vector<1x32xf32> to vector<512x32xf32>
    %5 = arith.addf %2, %4 : vector<512x32xf32>
    %cst_5 = arith.constant 0.000000e+00 : f32
    %6 = vector.broadcast %cst_5 : f32 to vector<512x32xf32>
    %7 = arith.maximumf %5, %6 : vector<512x32xf32>
    %c0_6 = arith.constant 0 : index
    %c0_7 = arith.constant 0 : index
    %8 = vector.load %arg4[%c0_6, %c0_7] : memref<512x32xf32, #tpu.memory_space<vmem>>, vector<512x32xf32>
    tpu.vector_store %arg4[%c0_6, %c0_7], %7 {strides = array<i32>} : memref<512x32xf32, #tpu.memory_space<vmem>>, vector<512x32xf32>,
    return
  }
  func.func @transform_0(%arg0: i32) -> (i32, i32) {
    %c0_i32 = arith.constant 0 : i32
    %c0_i32_0 = arith.constant 0 : i32
    return %arg0, %c0_i32 : i32, i32
  }
  func.func @transform_1(%arg0: i32) -> (i32, i32) {
    %c0_i32 = arith.constant 0 : i32
    %c0_i32_0 = arith.constant 0 : i32
    %c0_i32_1 = arith.constant 0 : i32
    return %c0_i32, %c0_i32_0 : i32, i32
  }
  func.func @transform_2(%arg0: i32) -> (i32, i32) {
    %c0_i32 = arith.constant 0 : i32
    %c0_i32_0 = arith.constant 0 : i32
    %c0_i32_1 = arith.constant 0 : i32
    return %c0_i32, %c0_i32_0 : i32, i32
  }
  func.func @transform_3(%arg0: i32) -> (i32, i32) {
    %c0_i32 = arith.constant 0 : i32
    %c0_i32_0 = arith.constant 0 : i32
    return %arg0, %c0_i32 : i32, i32
  }
}

module attributes {stable_mosaic.version = 11 : i64} {
  func.func @_fuse_upsample_conv2_kernel(%arg0: i32, %arg1: i32, %arg2: memref<1x256x32xf32, #tpu.memory_space<vmem>>, %arg3: memref<32x8xf32, #tpu.memory_space<vmem>>, %arg4: memref<256x144xf32, #tpu.memory_space<vmem>>, %arg5: memref<1x144x8xf32, #tpu.memory_space<vmem>>, %arg6: memref<1x8xf32, #tpu.memory_space<vmem>>, %arg7: memref<1x256x8xf32, #tpu.memory_space<vmem>>) attributes {dimension_semantics = [#tpu.dimension_semantics<parallel>, #tpu.dimension_semantics<parallel>], iteration_bounds = array<i64: 2, 1>, scalar_prefetch = 0 : i64, scratch_operands = 0 : i64, tpu.core_type = #tpu.core_type<tc>, window_params = [{transform_indices = @transform_0, window_bounds = array<i64: 1, 256, 32>}, {pipeline_mode = #tpu.pipeline_mode<synchronous>, transform_indices = @transform_1, window_bounds = array<i64: 32, 8>}, {transform_indices = @transform_2, window_bounds = array<i64: 256, 144>}, {transform_indices = @transform_3, window_bounds = array<i64: 1, 144, 8>}, {pipeline_mode = #tpu.pipeline_mode<synchronous>, transform_indices = @transform_4, window_bounds = array<i64: 1, 8>}, {transform_indices = @transform_5, window_bounds = array<i64: 1, 256, 8>}]} {
    %c0 = arith.constant 0 : index
    %c0_0 = arith.constant 0 : index
    %c0_1 = arith.constant 0 : index
    %0 = vector.load %arg2[%c0, %c0_0, %c0_1] : memref<1x256x32xf32, #tpu.memory_space<vmem>>, vector<1x256x32xf32>
    %1 = vector.shape_cast %0 : vector<1x256x32xf32> to vector<256x32xf32>
    %c0_2 = arith.constant 0 : index
    %c0_3 = arith.constant 0 : index
    %2 = vector.load %arg3[%c0_2, %c0_3] : memref<32x8xf32, #tpu.memory_space<vmem>>, vector<32x8xf32>
    %cst = arith.constant dense<0.000000e+00> : vector<256x8xf32>
    %3 = tpu.matmul %1, %2, %cst {dimension_numbers = #tpu.dot_dimension_numbers<[1], [0], [0], [1], [0, 0, 1, 1], [], []>} : vector<256x32xf32>, vector<32x8xf32>, vector<256x8xf32> -> vector<256x8xf32>
    %c0_4 = arith.constant 0 : index
    %c0_5 = arith.constant 0 : index
    %4 = vector.load %arg4[%c0_4, %c0_5] : memref<256x144xf32, #tpu.memory_space<vmem>>, vector<256x144xf32>
    %c0_6 = arith.constant 0 : index
    %c0_7 = arith.constant 0 : index
    %c0_8 = arith.constant 0 : index
    %5 = vector.load %arg5[%c0_6, %c0_7, %c0_8] : memref<1x144x8xf32, #tpu.memory_space<vmem>>, vector<1x144x8xf32>
    %6 = vector.shape_cast %5 : vector<1x144x8xf32> to vector<144x8xf32>
    %cst_9 = arith.constant dense<0.000000e+00> : vector<256x8xf32>
    %7 = tpu.matmul %4, %6, %cst_9 {dimension_numbers = #tpu.dot_dimension_numbers<[1], [0], [0], [1], [0, 0, 1, 1], [], []>} : vector<256x144xf32>, vector<144x8xf32>, vector<256x8xf32> -> vector<256x8xf32>
    %8 = arith.addf %3, %7 : vector<256x8xf32>
    %c0_10 = arith.constant 0 : index
    %c0_11 = arith.constant 0 : index
    %9 = vector.load %arg6[%c0_10, %c0_11] : memref<1x8xf32, #tpu.memory_space<vmem>>, vector<1x8xf32>
    %10 = vector.broadcast %9 : vector<1x8xf32> to vector<256x8xf32>
    %11 = arith.addf %8, %10 : vector<256x8xf32>
    %cst_12 = arith.constant 0.000000e+00 : f32
    %12 = vector.broadcast %cst_12 : f32 to vector<256x8xf32>
    %13 = arith.maximumf %11, %12 : vector<256x8xf32>
    %14 = vector.shape_cast %13 : vector<256x8xf32> to vector<1x256x8xf32>
    %c0_13 = arith.constant 0 : index
    %c0_14 = arith.constant 0 : index
    %c0_15 = arith.constant 0 : index
    %15 = vector.load %arg7[%c0_13, %c0_14, %c0_15] : memref<1x256x8xf32, #tpu.memory_space<vmem>>, vector<1x256x8xf32>
    tpu.vector_store %arg7[%c0_13, %c0_14, %c0_15], %14 {strides = array<i32>} : memref<1x256x8xf32, #tpu.memory_space<vmem>>, vector<1x256x8xf32>,
    return
  }
  func.func @transform_0(%arg0: i32, %arg1: i32) -> (i32, i32, i32) {
    %c0_i32 = arith.constant 0 : i32
    %c0_i32_0 = arith.constant 0 : i32
    return %arg0, %arg1, %c0_i32 : i32, i32, i32
  }
  func.func @transform_1(%arg0: i32, %arg1: i32) -> (i32, i32) {
    %c0_i32 = arith.constant 0 : i32
    %c0_i32_0 = arith.constant 0 : i32
    %c0_i32_1 = arith.constant 0 : i32
    return %c0_i32, %c0_i32_0 : i32, i32
  }
  func.func @transform_2(%arg0: i32, %arg1: i32) -> (i32, i32) {
    %c0_i32 = arith.constant 0 : i32
    %c0_i32_0 = arith.constant 0 : i32
    return %arg1, %c0_i32 : i32, i32
  }
  func.func @transform_3(%arg0: i32, %arg1: i32) -> (i32, i32, i32) {
    %c0_i32 = arith.constant 0 : i32
    %c0_i32_0 = arith.constant 0 : i32
    %c0_i32_1 = arith.constant 0 : i32
    return %arg0, %c0_i32, %c0_i32_0 : i32, i32, i32
  }
  func.func @transform_4(%arg0: i32, %arg1: i32) -> (i32, i32) {
    %c0_i32 = arith.constant 0 : i32
    %c0_i32_0 = arith.constant 0 : i32
    %c0_i32_1 = arith.constant 0 : i32
    return %c0_i32, %c0_i32_0 : i32, i32
  }
  func.func @transform_5(%arg0: i32, %arg1: i32) -> (i32, i32, i32) {
    %c0_i32 = arith.constant 0 : i32
    %c0_i32_0 = arith.constant 0 : i32
    return %arg0, %arg1, %c0_i32 : i32, i32, i32
  }
}

</mosaic_0001>

<llo_original>
// kernel: spp_forward.4
$region0: #{spp_forward.4}
  #allocation0 [shape = 'u32[]', space=smem, size = 0x4, offset = 0x4, fixed_abs, tag = 'smem constant byte address 0x4 - core index']
  #allocation1 [shape = 'u32[144,128]{1,0:T(1,128)}', space=vmem, size = 0x12000, scoped, tag = 'internal scratch']
  %s0 = inlined_call_operand.vmem [shape: f32[2,256,32], index: 0, kind: input, shape index: {}]
  %s1 = inlined_call_operand.vmem [shape: f32[4,36,256], index: 1, kind: input, shape index: {}]
  %s2 = inlined_call_operand.vmem [shape: f32[4,32,8], index: 2, kind: input, shape index: {}]
  %s3 = inlined_call_operand.vmem [shape: f32[4,1,8], index: 3, kind: input, shape index: {}]
  %s4 = inlined_call_operand.vmem [shape: f32[4,8,8], index: 4, kind: input, shape index: {}]
  %s5 = inlined_call_operand.vmem [shape: f32[2,4,36,8], index: 5, kind: output, shape index: {}]
  %s6 = sld [smem:[#allocation0]]
  $region53: #{spp_forward.4} parent=0
    _
  %s8 = ssub.s32 1, %s6
  %s9 = scalar_select 0, %s8, %s6
  loop: start=0, step=1, limit=10
  $region2: #{spp_forward.4} parent=0 // loop_pre_header
    _
  $region3: #{spp_forward.4} parent=0 // loop_header
    %s11 = sphi 0, %s15
    %p12 = scmp.ge.s32.totalorder %s11, 10
    %s18 = sphi 0, %s30
    %s19 = sphi 0, %s26
    %s20 = sphi 0, %s18
    %s21 = sphi 0, %s19
    %s22 = sphi 0, %s20
    %s23 = sphi 0, %s21
    %s33 = sphi 0, %s35
    %s36 = sphi 0, %s33
    %s37 = sphi 0, %s36
    %s53 = sphi 0, %s37
    %s59 = sphi 0, %s61
    %s62 = sphi 0, %s59
    %s63 = sphi 0, %s62
    %s79 = sphi 0, %s63
    %s85 = sphi 0, %s87
    %s88 = sphi 0, %s85
    %s89 = sphi 0, %s88
    %s105 = sphi 0, %s89
    %s111 = sphi 0, %s113
    %s114 = sphi 0, %s111
    %s115 = sphi 0, %s114
    %s131 = sphi 0, %s115
    %s137 = sphi 0, %s139
    %s140 = sphi 0, %s137
    %s141 = sphi 0, %s140
    %s157 = sphi 0, %s141
    %s165 = sphi 0, %s167
    %s168 = sphi 0, %s165
    %s169 = sphi 0, %s168
    %s185 = sphi 0, %s169
  $region4: #{spp_forward.4} parent=0 // loop_header_branch
    %14 = sbr.rel (%p12) target = $region8
  $region5: #{spp_forward.4} parent=0 // loop_body
    %s16 = ssub.s32 %s11, 1
    %s17 = ssub.s32 %s11, 2
    %s24 = sadd.s32 1, %s19
    %p25 = scmp.ge.s32.totalorder %s24, 4
    %s26 = scalar_select %p25, 0, %s24
    %s27 = sadd.s32 1, %s18
    %s28 = scalar_select %p25, %s27, %s18
    %p29 = scmp.ge.s32.totalorder %s28, 2
    %s30 = scalar_select %p29, 0, %s28
    %s31 = ssub.s32 %s18, %s30
    %p32 = scmp.eq.s32.totalorder %s31, 0
    %s34 = sadd.s32 %s33, 1
    %s35 = scalar_select %p32, %s33, %s34
    %p38 = pneg %p32
    %p39 = scmp.eq.s32.totalorder %s11, 7
    %p40 = por %p38, %p39
    %p41 = scmp.ne.s32.totalorder %s33, %s36
    %p42 = scmp.eq.s32.totalorder %s11, 0
    %p43 = por %p41, %p42
    %p44 = scmp.ne.s32.totalorder %s33, %s36
    %p45 = scmp.eq.s32.totalorder %s16, 7
    %p46 = por %p44, %p45
    %p47 = scmp.ne.s32.totalorder %s36, %s37
    %p48 = scmp.eq.s32.totalorder %s16, 0
    %p49 = por %p47, %p48
    %p50 = scmp.ne.s32.totalorder %s36, %s37
    %p51 = scmp.eq.s32.totalorder %s17, 7
    %p52 = por %p50, %p51
    %p54 = scmp.ne.s32.totalorder %s37, %s53
    %p55 = scmp.eq.s32.totalorder %s17, 0
    %p56 = por %p54, %p55
    %s57 = ssub.s32 %s19, %s26
    %p58 = scmp.eq.s32.totalorder %s57, 0
    %s60 = sadd.s32 %s59, 1
    %s61 = scalar_select %p58, %s59, %s60
    %p64 = pneg %p58
    %p65 = scmp.eq.s32.totalorder %s11, 7
    %p66 = por %p64, %p65
    %p67 = scmp.ne.s32.totalorder %s59, %s62
    %p68 = scmp.eq.s32.totalorder %s11, 0
    %p69 = por %p67, %p68
    %p70 = scmp.ne.s32.totalorder %s59, %s62
    %p71 = scmp.eq.s32.totalorder %s16, 7
    %p72 = por %p70, %p71
    %p73 = scmp.ne.s32.totalorder %s62, %s63
    %p74 = scmp.eq.s32.totalorder %s16, 0
    %p75 = por %p73, %p74
    %p76 = scmp.ne.s32.totalorder %s62, %s63
    %p77 = scmp.eq.s32.totalorder %s17, 7
    %p78 = por %p76, %p77
    %p80 = scmp.ne.s32.totalorder %s63, %s79
    %p81 = scmp.eq.s32.totalorder %s17, 0
    %p82 = por %p80, %p81
    %s83 = ssub.s32 %s19, %s26
    %p84 = scmp.eq.s32.totalorder %s83, 0
    %s86 = sadd.s32 %s85, 1
    %s87 = scalar_select %p84, %s85, %s86
    %p90 = pneg %p84
    %p91 = scmp.eq.s32.totalorder %s11, 7
    %p92 = por %p90, %p91
    %p93 = scmp.ne.s32.totalorder %s85, %s88
    %p94 = scmp.eq.s32.totalorder %s11, 0
    %p95 = por %p93, %p94
    %p96 = scmp.ne.s32.totalorder %s85, %s88
    %p97 = scmp.eq.s32.totalorder %s16, 7
    %p98 = por %p96, %p97
    %p99 = scmp.ne.s32.totalorder %s88, %s89
    %p100 = scmp.eq.s32.totalorder %s16, 0
    %p101 = por %p99, %p100
    %p102 = scmp.ne.s32.totalorder %s88, %s89
    %p103 = scmp.eq.s32.totalorder %s17, 7
    %p104 = por %p102, %p103
    %p106 = scmp.ne.s32.totalorder %s89, %s105
    %p107 = scmp.eq.s32.totalorder %s17, 0
    %p108 = por %p106, %p107
    %s109 = ssub.s32 %s19, %s26
    %p110 = scmp.eq.s32.totalorder %s109, 0
    %s112 = sadd.s32 %s111, 1
    %s113 = scalar_select %p110, %s111, %s112
    %p116 = pneg %p110
    %p117 = scmp.eq.s32.totalorder %s11, 7
    %p118 = por %p116, %p117
    %p119 = scmp.ne.s32.totalorder %s111, %s114
    %p120 = scmp.eq.s32.totalorder %s11, 0
    %p121 = por %p119, %p120
    %p122 = scmp.ne.s32.totalorder %s111, %s114
    %p123 = scmp.eq.s32.totalorder %s16, 7
    %p124 = por %p122, %p123
    %p125 = scmp.ne.s32.totalorder %s114, %s115
    %p126 = scmp.eq.s32.totalorder %s16, 0
    %p127 = por %p125, %p126
    %p128 = scmp.ne.s32.totalorder %s114, %s115
    %p129 = scmp.eq.s32.totalorder %s17, 7
    %p130 = por %p128, %p129
    %p132 = scmp.ne.s32.totalorder %s115, %s131
    %p133 = scmp.eq.s32.totalorder %s17, 0
    %p134 = por %p132, %p133
    %s135 = ssub.s32 %s19, %s26
    %p136 = scmp.eq.s32.totalorder %s135, 0
    %s138 = sadd.s32 %s137, 1
    %s139 = scalar_select %p136, %s137, %s138
    %p142 = pneg %p136
    %p143 = scmp.eq.s32.totalorder %s11, 7
    %p144 = por %p142, %p143
    %p145 = scmp.ne.s32.totalorder %s137, %s140
    %p146 = scmp.eq.s32.totalorder %s11, 0
    %p147 = por %p145, %p146
    %p148 = scmp.ne.s32.totalorder %s137, %s140
    %p149 = scmp.eq.s32.totalorder %s16, 7
    %p150 = por %p148, %p149
    %p151 = scmp.ne.s32.totalorder %s140, %s141
    %p152 = scmp.eq.s32.totalorder %s16, 0
    %p153 = por %p151, %p152
    %p154 = scmp.ne.s32.totalorder %s140, %s141
    %p155 = scmp.eq.s32.totalorder %s17, 7
    %p156 = por %p154, %p155
    %p158 = scmp.ne.s32.totalorder %s141, %s157
    %p159 = scmp.eq.s32.totalorder %s17, 0
    %p160 = por %p158, %p159
    %s161 = ssub.s32 %s18, %s30
    %s162 = ssub.s32 %s19, %s26
    %s163 = sor.u32 %s161, %s162
    %p164 = scmp.eq.s32.totalorder %s163, 0
    %s166 = sadd.s32 %s165, 1
    %s167 = scalar_select %p164, %s165, %s166
    %p170 = pneg %p164
    %p171 = scmp.eq.s32.totalorder %s11, 7
    %p172 = por %p170, %p171
    %p173 = scmp.ne.s32.totalorder %s165, %s168
    %p174 = scmp.eq.s32.totalorder %s11, 0
    %p175 = por %p173, %p174
    %p176 = scmp.ne.s32.totalorder %s165, %s168
    %p177 = scmp.eq.s32.totalorder %s16, 7
    %p178 = por %p176, %p177
    %p179 = scmp.ne.s32.totalorder %s168, %s169
    %p180 = scmp.eq.s32.totalorder %s16, 0
    %p181 = por %p179, %p180
    %p182 = scmp.ne.s32.totalorder %s168, %s169
    %p183 = scmp.eq.s32.totalorder %s17, 7
    %p184 = por %p182, %p183
    %p186 = scmp.ne.s32.totalorder %s169, %s185
    %p187 = scmp.eq.s32.totalorder %s17, 0
    %p188 = por %p186, %p187
    %p189 = scmp.le.s32.totalorder 1, %s11
    %p190 = scmp.lt.s32.totalorder %s11, 9
    %p191 = pnand %p189, %p190
    %p192 = pneg %p191
    // Predicated region
    $region9: #{spp_forward.4} parent=5 // pred_check
      _
    $region10: #{spp_forward.4} parent=5 // pred_check_branch
      %194 = sbr.rel (%p191) target = $region12
    $region11: #{spp_forward.4} parent=5 // pred_region
      %s195 = ssub.s32 %s11, 1
    $region12: #{spp_forward.4} parent=5 // pred_fallthru
      _
    %p196 = scmp.lt.s32.totalorder %s11, 8
    // Predicated region
    $region13: #{spp_forward.4} parent=5 // pred_check
      %p197 = pneg %p196
    $region14: #{spp_forward.4} parent=5 // pred_check_branch
      %199 = sbr.rel (%p197) target = $region16
    $region15: #{spp_forward.4} parent=5 // pred_region
      // Predicated region
      $region17: #{spp_forward.4} parent=15 // pred_check
        %p200 = pneg %p43
      $region18: #{spp_forward.4} parent=15 // pred_check_branch
        %202 = sbr.rel (%p200) target = $region20
      $region19: #{spp_forward.4} parent=15 // pred_region
        %p203 = scmp.lt.s32.totalorder %s18, 1
        %s204 = scalar_select %p203, %s18, 1
        %s205 = smul.addr %s204, 32
        %s206 = smul.addr %s205, 8
        %s207 = scalar_lea.vmem %s0, %s206
      $region20: #{spp_forward.4} parent=15 // pred_fallthru
        _
      // Predicated region
      $region21: #{spp_forward.4} parent=15 // pred_check
        %p208 = pneg %p69
      $region22: #{spp_forward.4} parent=15 // pred_check_branch
        %210 = sbr.rel (%p208) target = $region24
      $region23: #{spp_forward.4} parent=15 // pred_region
        %p211 = scmp.lt.s32.totalorder %s19, 3
        %s212 = scalar_select %p211, %s19, 3
        %s213 = smul.addr %s212, 10
        %s214 = smul.addr %s213, 8
        %s215 = scalar_lea.vmem %s1, %s214
      $region24: #{spp_forward.4} parent=15 // pred_fallthru
        _
      // Predicated region
      $region25: #{spp_forward.4} parent=15 // pred_check
        %p216 = pneg %p95
      $region26: #{spp_forward.4} parent=15 // pred_check_branch
        %218 = sbr.rel (%p216) target = $region28
      $region27: #{spp_forward.4} parent=15 // pred_region
        %p219 = scmp.lt.s32.totalorder %s19, 3
        %s220 = scalar_select %p219, %s19, 3
        %s221 = smul.addr %s220, 4
        %s222 = smul.addr %s221, 8
        %s223 = scalar_lea.vmem %s2, %s222
      $region28: #{spp_forward.4} parent=15 // pred_fallthru
        _
      // Predicated region
      $region29: #{spp_forward.4} parent=15 // pred_check
        %p224 = pneg %p121
      $region30: #{spp_forward.4} parent=15 // pred_check_branch
        %226 = sbr.rel (%p224) target = $region32
      $region31: #{spp_forward.4} parent=15 // pred_region
        %p227 = scmp.lt.s32.totalorder %s19, 3
        %s228 = scalar_select %p227, %s19, 3
        %s229 = scalar_lea.vmem %s3, %s228
      $region32: #{spp_forward.4} parent=15 // pred_fallthru
        _
      // Predicated region
      $region33: #{spp_forward.4} parent=15 // pred_check
        %p230 = pneg %p147
      $region34: #{spp_forward.4} parent=15 // pred_check_branch
        %232 = sbr.rel (%p230) target = $region36
      $region35: #{spp_forward.4} parent=15 // pred_region
        %p233 = scmp.lt.s32.totalorder %s19, 3
        %s234 = scalar_select %p233, %s19, 3
        %s235 = smul.addr %s234, 8
        %s236 = scalar_lea.vmem %s4, %s235
      $region36: #{spp_forward.4} parent=15 // pred_fallthru
        _
    $region16: #{spp_forward.4} parent=5 // pred_fallthru
      _
    %p237 = scmp.le.s32.totalorder 1, %s11
    %p238 = scmp.lt.s32.totalorder %s11, 9
    %p239 = pnand %p237, %p238
    %p240 = pneg %p239
    // Predicated region
    $region37: #{spp_forward.4} parent=5 // pred_check
      _
    $region38: #{spp_forward.4} parent=5 // pred_check_branch
      %242 = sbr.rel (%p239) target = $region40
    $region39: #{spp_forward.4} parent=5 // pred_region
      %s243 = ssub.s32 %s11, 1
      %p244 = scmp.lt.s32.totalorder %s20, 1
      %s245 = scalar_select %p244, %s20, 1
      %s246 = smul.addr %s245, 32
      %s247 = smul.addr %s246, 8
      %s248 = scalar_lea.vmem %s0, %s247
      %p249 = pneg %p49
      %p250 = pneg %p46
      %p251 = scmp.lt.s32.totalorder %s21, 3
      %s252 = scalar_select %p251, %s21, 3
      %s253 = smul.addr %s252, 10
      %s254 = smul.addr %s253, 8
      %s255 = scalar_lea.vmem %s1, %s254
      %p256 = pneg %p75
      %p257 = pneg %p72
      %p258 = scmp.lt.s32.totalorder %s21, 3
      %s259 = scalar_select %p258, %s21, 3
      %s260 = smul.addr %s259, 4
      %s261 = smul.addr %s260, 8
      %s262 = scalar_lea.vmem %s2, %s261
      %p263 = pneg %p101
      %p264 = pneg %p98
      %p265 = scmp.lt.s32.totalorder %s21, 3
      %s266 = scalar_select %p265, %s21, 3
      %s267 = scalar_lea.vmem %s3, %s266
      %p268 = pneg %p127
      %p269 = pneg %p124
      %p270 = scmp.lt.s32.totalorder %s21, 3
      %s271 = scalar_select %p270, %s21, 3
      %s272 = smul.addr %s271, 8
      %s273 = scalar_lea.vmem %s4, %s272
      %p274 = pneg %p153
      %p275 = pneg %p150
      %p276 = pneg %p181
      %p277 = pneg %p178
      %p278 = scmp.lt.s32.totalorder %s20, 1
      %s279 = scalar_select %p278, %s20, 1
      %p280 = scmp.lt.s32.totalorder %s21, 3
      %s281 = scalar_select %p280, %s21, 3
      %s282 = smul.addr %s281, 5
      %s283 = smul.addr %s279, 20
      %s284 = sadd.s32 %s282, %s283
      %s285 = smul.addr %s284, 8
      %s286 = scalar_lea.vmem %s5, %s285
      %p287 = scmp.lt.s32.totalorder %s20, 1
      %s288 = scalar_select %p287, %s20, 1
      %s289 = smul.addr %s288, 32
      %s290 = smul.addr %s289, 8
      %s291 = scalar_lea.vmem %s0, %s290
      %p292 = scmp.lt.s32.totalorder %s21, 3
      %s293 = scalar_select %p292, %s21, 3
      %s294 = smul.addr %s293, 10
      %s295 = smul.addr %s294, 8
      %s296 = scalar_lea.vmem %s1, %s295
      %p297 = scmp.lt.s32.totalorder %s21, 3
      %s298 = scalar_select %p297, %s21, 3
      %s299 = smul.addr %s298, 4
      %s300 = smul.addr %s299, 8
      %s301 = scalar_lea.vmem %s2, %s300
      %p302 = scmp.lt.s32.totalorder %s21, 3
      %s303 = scalar_select %p302, %s21, 3
      %s304 = scalar_lea.vmem %s3, %s303
      %p305 = scmp.lt.s32.totalorder %s21, 3
      %s306 = scalar_select %p305, %s21, 3
      %s307 = smul.addr %s306, 8
      %s308 = scalar_lea.vmem %s4, %s307
      %p309 = scmp.lt.s32.totalorder %s20, 1
      %s310 = scalar_select %p309, %s20, 1
      %p311 = scmp.lt.s32.totalorder %s21, 3
      %s312 = scalar_select %p311, %s21, 3
      %s313 = smul.addr %s312, 5
      %s314 = smul.addr %s310, 20
      %s315 = sadd.s32 %s313, %s314
      %s316 = smul.addr %s315, 8
      %s317 = scalar_lea.vmem %s5, %s316
      %v318 = vld [vmem:[%s296] sm:$0xff]
      %v319 = vld [vmem:[%s296 + $0x8] sm:$0xff]
      %v320 = vld [vmem:[%s296 + $0x10] sm:$0xff]
      %v321 = vld [vmem:[%s296 + $0x18] sm:$0xff]
      %v322 = vld [vmem:[%s296 + $0x20] sm:$0xff]
      %v323 = vld [vmem:[%s296 + $0x28] sm:$0xff]
      %v324 = vld [vmem:[%s296 + $0x30] sm:$0xff]
      %v325 = vld [vmem:[%s296 + $0x38] sm:$0xff]
      %v326 = vld [vmem:[%s296 + $0x40] sm:$0xf]
      %v327 = vld [vmem:[%s296 + $0x48] sm:$0xf]
      %v328 = vld [vmem:[%s291] sm:$0xff]
      %v329 = vld [vmem:[%s291 + $0x8] sm:$0xff]
      %v330 = vld [vmem:[%s291 + $0x10] sm:$0xff]
      %v331 = vld [vmem:[%s291 + $0x18] sm:$0xff]
      %v332 = vld [vmem:[%s291 + $0x20] sm:$0xff]
      %v333 = vld [vmem:[%s291 + $0x28] sm:$0xff]
      %v334 = vld [vmem:[%s291 + $0x30] sm:$0xff]
      %v335 = vld [vmem:[%s291 + $0x38] sm:$0xff]
      %v336 = vld [vmem:[%s291 + $0x40] sm:$0xff]
      %v337 = vld [vmem:[%s291 + $0x48] sm:$0xff]
      %v338 = vld [vmem:[%s291 + $0x50] sm:$0xff]
      %v339 = vld [vmem:[%s291 + $0x58] sm:$0xff]
      %v340 = vld [vmem:[%s291 + $0x60] sm:$0xff]
      %v341 = vld [vmem:[%s291 + $0x68] sm:$0xff]
      %v342 = vld [vmem:[%s291 + $0x70] sm:$0xff]
      %v343 = vld [vmem:[%s291 + $0x78] sm:$0xff]
      %v344 = vld [vmem:[%s291 + $0x80] sm:$0xff]
      %v345 = vld [vmem:[%s291 + $0x88] sm:$0xff]
      %v346 = vld [vmem:[%s291 + $0x90] sm:$0xff]
      %v347 = vld [vmem:[%s291 + $0x98] sm:$0xff]
      %v348 = vld [vmem:[%s291 + $0xa0] sm:$0xff]
      %v349 = vld [vmem:[%s291 + $0xa8] sm:$0xff]
      %v350 = vld [vmem:[%s291 + $0xb0] sm:$0xff]
      %v351 = vld [vmem:[%s291 + $0xb8] sm:$0xff]
      %v352 = vld [vmem:[%s291 + $0xc0] sm:$0xff]
      %v353 = vld [vmem:[%s291 + $0xc8] sm:$0xff]
      %v354 = vld [vmem:[%s291 + $0xd0] sm:$0xff]
      %v355 = vld [vmem:[%s291 + $0xd8] sm:$0xff]
      %v356 = vld [vmem:[%s291 + $0xe0] sm:$0xff]
      %v357 = vld [vmem:[%s291 + $0xe8] sm:$0xff]
      %v358 = vld [vmem:[%s291 + $0xf0] sm:$0xff]
      %v359 = vld [vmem:[%s291 + $0xf8] sm:$0xff]
      %360 = vmatprep.subr.mxu0 0.0
      %361 = vmatpush1.msra.mxu0 %v343
      %362 = vmatprep.subr.mxu0 0.0
      %363 = vmatpush1.msra.mxu0 %v342
      %364 = vmatprep.subr.mxu0 0.0
      %365 = vmatpush1.msra.mxu0 %v341
      %366 = vmatprep.subr.mxu0 0.0
      %367 = vmatpush1.msra.mxu0 %v340
      %368 = vmatprep.subr.mxu0 0.0
      %369 = vmatpush1.msra.mxu0 %v339
      %370 = vmatprep.subr.mxu0 0.0
      %371 = vmatpush1.msra.mxu0 %v338
      %372 = vmatprep.subr.mxu0 0.0
      %373 = vmatpush1.msra.mxu0 %v337
      %374 = vmatprep.subr.mxu0 0.0
      %375 = vmatpush1.msra.mxu0 %v336
      %376 = vmatprep.subr.mxu0 0.0
      %377 = vmatpush1.msra.mxu0 %v335
      %378 = vmatprep.subr.mxu0 0.0
      %379 = vmatpush1.msra.mxu0 %v334
      %380 = vmatprep.subr.mxu0 0.0
      %381 = vmatpush1.msra.mxu0 %v333
      %382 = vmatprep.subr.mxu0 0.0
      %383 = vmatpush1.msra.mxu0 %v332
      %384 = vmatprep.subr.mxu0 0.0
      %385 = vmatpush1.msra.mxu0 %v331
      %386 = vmatprep.subr.mxu0 0.0
      %387 = vmatpush1.msra.mxu0 %v330
      %388 = vmatprep.subr.mxu0 0.0
      %389 = vmatpush1.msra.mxu0 %v329
      %390 = vmatprep.subr.mxu0 0.0
      %391 = vmatpush1.msra.mxu0 %v328
      %392 = vmatprep.subr.mxu0 0.0
      %393 = vmatpush2.msra.mxu0 %v359
      %394 = vmatprep.subr.mxu0 0.0
      %395 = vmatpush2.msra.mxu0 %v358
      %396 = vmatprep.subr.mxu0 0.0
      %397 = vmatpush2.msra.mxu0 %v357
      %398 = vmatprep.subr.mxu0 0.0
      %399 = vmatpush2.msra.mxu0 %v356
      %400 = vmatprep.subr.mxu0 0.0
      %401 = vmatpush2.msra.mxu0 %v355
      %402 = vmatprep.subr.mxu0 0.0
      %403 = vmatpush2.msra.mxu0 %v354
      %404 = vmatprep.subr.mxu0 0.0
      %405 = vmatpush2.msra.mxu0 %v353
      %406 = vmatprep.subr.mxu0 0.0
      %407 = vmatpush2.msra.mxu0 %v352
      %408 = vmatprep.subr.mxu0 0.0
      %409 = vmatpush2.msra.mxu0 %v351
      %410 = vmatprep.subr.mxu0 0.0
      %411 = vmatpush2.msra.mxu0 %v350
      %412 = vmatprep.subr.mxu0 0.0
      %413 = vmatpush2.msra.mxu0 %v349
      %414 = vmatprep.subr.mxu0 0.0
      %415 = vmatpush2.msra.mxu0 %v348
      %416 = vmatprep.subr.mxu0 0.0
      %417 = vmatpush2.msra.mxu0 %v347
      %418 = vmatprep.subr.mxu0 0.0
      %419 = vmatpush2.msra.mxu0 %v346
      %420 = vmatprep.subr.mxu0 0.0
      %421 = vmatpush2.msra.mxu0 %v345
      %422 = vmatprep.subr.mxu0 0.0
      %423 = vmatpush2.msra.mxu0 %v344
      %424 = vmatprep.mubr.f32.mxu0 %v319
      %425 = vmatmul.mubr.f32.gmra.mxu0 %v318
      %v426 = vpop.f32.mrf.mxu0
      %v427 = vadd.f32 0.0, %v426
      %v428 = vpop.f32.mrf.mxu0
      %429 = vmatprep.mubr.f32.mxu0 %v321
      %430 = vmatmul.mubr.f32.gmra.mxu0 %v320
      %v431 = vpop.f32.mrf.mxu0
      %v432 = vadd.f32 0.0, %v431
      %v433 = vpop.f32.mrf.mxu0
      %434 = vmatprep.mubr.f32.mxu0 %v323
      %435 = vmatmul.mubr.f32.gmra.mxu0 %v322
      %v436 = vpop.f32.mrf.mxu0
      %v437 = vadd.f32 0.0, %v436
      %v438 = vpop.f32.mrf.mxu0
      %439 = vmatprep.mubr.f32.mxu0 %v325
      %440 = vmatmul.mubr.f32.gmra.mxu0 %v324
      %v441 = vpop.f32.mrf.mxu0
      %v442 = vadd.f32 0.0, %v441
      %v443 = vpop.f32.mrf.mxu0
      %444 = vmatprep.mubr.f32.mxu0 %v327
      %445 = vmatmul.mubr.f32.gmra.mxu0 %v326
      %v446 = vpop.f32.mrf.mxu0
      %v447 = vadd.f32 0.0, %v446
      %v448 = vpop.f32.mrf.mxu0
      %449 = vdwg.mxu0
      %v450 = vld [vmem:[%s301] sm:$0xff]
      %v451 = vld [vmem:[%s301 + $0x8] sm:$0xff]
      %v452 = vld [vmem:[%s301 + $0x10] sm:$0xff]
      %v453 = vld [vmem:[%s301 + $0x18] sm:$0xff]
      %v454 = vld [vmem:[%s304] sm:$0x1]
      %v456 = vlaneseq
      %v457 = vshrl.u32 %v456, 7
      %v458 = vsub.s32 0, %v457
      %v459 = vrot.slane %v454, %v458
      %vm461 = vcmask 261120
      %v463 = vsel %vm461, %v427, 0
      %v466 = vsel %vm461, %v432, 0
      %v469 = vsel %vm461, %v437, 0
      %v472 = vsel %vm461, %v442, 0
      %v475 = vsel %vm461, %v447, 0
      %477 = vmatprep.subr.mxu0 0.0
      %478 = vmatpush1.msra.mxu0 0.0
      %479 = vmatprep.subr.mxu0 0.0
      %480 = vmatpush1.msra.mxu0 0.0
      %481 = vmatprep.subr.mxu0 0.0
      %482 = vmatpush1.msra.mxu0 0.0
      %483 = vmatprep.subr.mxu0 0.0
      %484 = vmatpush1.msra.mxu0 0.0
      %485 = vmatprep.subr.mxu0 0.0
      %486 = vmatpush1.msra.mxu0 0.0
      %487 = vmatprep.subr.mxu0 0.0
      %488 = vmatpush1.msra.mxu0 0.0
      %489 = vmatprep.subr.mxu0 0.0
      %490 = vmatpush1.msra.mxu0 0.0
      %491 = vmatprep.subr.mxu0 0.0
      %492 = vmatpush1.msra.mxu0 0.0
      %493 = vmatprep.subr.mxu0 0.0
      %494 = vmatpush1.msra.mxu0 0.0
      %495 = vmatprep.subr.mxu0 0.0
      %496 = vmatpush1.msra.mxu0 0.0
      %497 = vmatprep.subr.mxu0 0.0
      %498 = vmatpush1.msra.mxu0 0.0
      %499 = vmatprep.subr.mxu0 0.0
      %500 = vmatpush1.msra.mxu0 0.0
      %501 = vmatprep.subr.mxu0 0.0
      %502 = vmatpush1.msra.mxu0 %v453
      %503 = vmatprep.subr.mxu0 0.0
      %504 = vmatpush1.msra.mxu0 %v452
      %505 = vmatprep.subr.mxu0 0.0
      %506 = vmatpush1.msra.mxu0 %v451
      %507 = vmatprep.subr.mxu0 0.0
      %508 = vmatpush1.msra.mxu0 %v450
      %509 = vmatprep.subr.mxu0 0.0
      %510 = vmatpush2.msra.mxu0 0.0
      %511 = vmatprep.subr.mxu0 0.0
      %512 = vmatpush2.msra.mxu0 0.0
      %513 = vmatprep.subr.mxu0 0.0
      %514 = vmatpush2.msra.mxu0 0.0
      %515 = vmatprep.subr.mxu0 0.0
      %516 = vmatpush2.msra.mxu0 0.0
      %517 = vmatprep.subr.mxu0 0.0
      %518 = vmatpush2.msra.mxu0 0.0
      %519 = vmatprep.subr.mxu0 0.0
      %520 = vmatpush2.msra.mxu0 0.0
      %521 = vmatprep.subr.mxu0 0.0
      %522 = vmatpush2.msra.mxu0 0.0
      %523 = vmatprep.subr.mxu0 0.0
      %524 = vmatpush2.msra.mxu0 0.0
      %525 = vmatprep.subr.mxu0 0.0
      %526 = vmatpush2.msra.mxu0 0.0
      %527 = vmatprep.subr.mxu0 0.0
      %528 = vmatpush2.msra.mxu0 0.0
      %529 = vmatprep.subr.mxu0 0.0
      %530 = vmatpush2.msra.mxu0 0.0
      %531 = vmatprep.subr.mxu0 0.0
      %532 = vmatpush2.msra.mxu0 0.0
      %533 = vmatprep.subr.mxu0 0.0
      %534 = vmatpush2.msra.mxu0 0.0
      %535 = vmatprep.subr.mxu0 0.0
      %536 = vmatpush2.msra.mxu0 0.0
      %537 = vmatprep.subr.mxu0 0.0
      %538 = vmatpush2.msra.mxu0 0.0
      %539 = vmatprep.subr.mxu0 0.0
      %540 = vmatpush2.msra.mxu0 0.0
      %541 = vmatprep.mubr.f32.mxu0 0.0
      %542 = vmatmul.mubr.f32.gmra.mxu0 %v463
      %v543 = vpop.f32.mrf.mxu0
      %v544 = vadd.f32 %v459, %v543
      %v545 = vpop.f32.mrf.mxu0
      %546 = vmatprep.mubr.f32.mxu0 0.0
      %547 = vmatmul.mubr.f32.gmra.mxu0 %v466
      %v548 = vpop.f32.mrf.mxu0
      %v549 = vadd.f32 %v459, %v548
      %v550 = vpop.f32.mrf.mxu0
      %551 = vmatprep.mubr.f32.mxu0 0.0
      %552 = vmatmul.mubr.f32.gmra.mxu0 %v469
      %v553 = vpop.f32.mrf.mxu0
      %v554 = vadd.f32 %v459, %v553
      %v555 = vpop.f32.mrf.mxu0
      %556 = vmatprep.mubr.f32.mxu0 0.0
      %557 = vmatmul.mubr.f32.gmra.mxu0 %v472
      %v558 = vpop.f32.mrf.mxu0
      %v559 = vadd.f32 %v459, %v558
      %v560 = vpop.f32.mrf.mxu0
      %561 = vmatprep.mubr.f32.mxu0 0.0
      %562 = vmatmul.mubr.f32.gmra.mxu0 %v475
      %v563 = vpop.f32.mrf.mxu0
      %v564 = vadd.f32 %v459, %v563
      %v565 = vpop.f32.mrf.mxu0
      %566 = vdwg.mxu0
      %v567 = vmax.f32 %v544, 0.0
      %v568 = vmax.f32 %v549, 0.0
      %v569 = vmax.f32 %v554, 0.0
      %v570 = vmax.f32 %v559, 0.0
      %v571 = vmax.f32 %v564, 0.0
      %v572 = vld [vmem:[%s308] sm:$0xff]
      %vm573 = vcmask 64512
      %v575 = vsel %vm573, %v567, 0
      %v578 = vsel %vm573, %v568, 0
      %v581 = vsel %vm573, %v569, 0
      %v584 = vsel %vm573, %v570, 0
      %v587 = vsel %vm573, %v571, 0
      %589 = vmatprep.subr.mxu0 0.0
      %590 = vmatpush1.msra.mxu0 0.0
      %591 = vmatprep.subr.mxu0 0.0
      %592 = vmatpush1.msra.mxu0 0.0
      %593 = vmatprep.subr.mxu0 0.0
      %594 = vmatpush1.msra.mxu0 0.0
      %595 = vmatprep.subr.mxu0 0.0
      %596 = vmatpush1.msra.mxu0 0.0
      %597 = vmatprep.subr.mxu0 0.0
      %598 = vmatpush1.msra.mxu0 0.0
      %599 = vmatprep.subr.mxu0 0.0
      %600 = vmatpush1.msra.mxu0 0.0
      %601 = vmatprep.subr.mxu0 0.0
      %602 = vmatpush1.msra.mxu0 0.0
      %603 = vmatprep.subr.mxu0 0.0
      %604 = vmatpush1.msra.mxu0 0.0
      %605 = vmatprep.subr.mxu0 0.0
      %606 = vmatpush1.msra.mxu0 0.0
      %607 = vmatprep.subr.mxu0 0.0
      %608 = vmatpush1.msra.mxu0 0.0
      %609 = vmatprep.subr.mxu0 0.0
      %610 = vmatpush1.msra.mxu0 0.0
      %611 = vmatprep.subr.mxu0 0.0
      %612 = vmatpush1.msra.mxu0 0.0
      %613 = vmatprep.subr.mxu0 0.0
      %614 = vmatpush1.msra.mxu0 0.0
      %615 = vmatprep.subr.mxu0 0.0
      %616 = vmatpush1.msra.mxu0 0.0
      %617 = vmatprep.subr.mxu0 0.0
      %618 = vmatpush1.msra.mxu0 0.0
      %619 = vmatprep.subr.mxu0 0.0
      %620 = vmatpush1.msra.mxu0 %v572
      %621 = vmatprep.subr.mxu0 0.0
      %622 = vmatpush2.msra.mxu0 0.0
      %623 = vmatprep.subr.mxu0 0.0
      %624 = vmatpush2.msra.mxu0 0.0
      %625 = vmatprep.subr.mxu0 0.0
      %626 = vmatpush2.msra.mxu0 0.0
      %627 = vmatprep.subr.mxu0 0.0
      %628 = vmatpush2.msra.mxu0 0.0
      %629 = vmatprep.subr.mxu0 0.0
      %630 = vmatpush2.msra.mxu0 0.0
      %631 = vmatprep.subr.mxu0 0.0
      %632 = vmatpush2.msra.mxu0 0.0
      %633 = vmatprep.subr.mxu0 0.0
      %634 = vmatpush2.msra.mxu0 0.0
      %635 = vmatprep.subr.mxu0 0.0
      %636 = vmatpush2.msra.mxu0 0.0
      %637 = vmatprep.subr.mxu0 0.0
      %638 = vmatpush2.msra.mxu0 0.0
      %639 = vmatprep.subr.mxu0 0.0
      %640 = vmatpush2.msra.mxu0 0.0
      %641 = vmatprep.subr.mxu0 0.0
      %642 = vmatpush2.msra.mxu0 0.0
      %643 = vmatprep.subr.mxu0 0.0
      %644 = vmatpush2.msra.mxu0 0.0
      %645 = vmatprep.subr.mxu0 0.0
      %646 = vmatpush2.msra.mxu0 0.0
      %647 = vmatprep.subr.mxu0 0.0
      %648 = vmatpush2.msra.mxu0 0.0
      %649 = vmatprep.subr.mxu0 0.0
      %650 = vmatpush2.msra.mxu0 0.0
      %651 = vmatprep.subr.mxu0 0.0
      %652 = vmatpush2.msra.mxu0 0.0
      %653 = vmatprep.mubr.f32.mxu0 0.0
      %654 = vmatmul.mubr.f32.gmra.mxu0 %v575
      %v655 = vpop.f32.mrf.mxu0
      %v656 = vadd.f32 0.0, %v655
      %v657 = vpop.f32.mrf.mxu0
      %658 = vmatprep.mubr.f32.mxu0 0.0
      %659 = vmatmul.mubr.f32.gmra.mxu0 %v578
      %v660 = vpop.f32.mrf.mxu0
      %v661 = vadd.f32 0.0, %v660
      %v662 = vpop.f32.mrf.mxu0
      %663 = vmatprep.mubr.f32.mxu0 0.0
      %664 = vmatmul.mubr.f32.gmra.mxu0 %v581
      %v665 = vpop.f32.mrf.mxu0
      %v666 = vadd.f32 0.0, %v665
      %v667 = vpop.f32.mrf.mxu0
      %668 = vmatprep.mubr.f32.mxu0 0.0
      %669 = vmatmul.mubr.f32.gmra.mxu0 %v584
      %v670 = vpop.f32.mrf.mxu0
      %v671 = vadd.f32 0.0, %v670
      %v672 = vpop.f32.mrf.mxu0
      %673 = vmatprep.mubr.f32.mxu0 0.0
      %674 = vmatmul.mubr.f32.gmra.mxu0 %v587
      %v675 = vpop.f32.mrf.mxu0
      %v676 = vadd.f32 0.0, %v675
      %v677 = vpop.f32.mrf.mxu0
      %678 = vdwg.mxu0
      %679 = vst.msk [vmem:[%s317] sm:$0xff] %vm573, %v656
      %680 = vst.msk [vmem:[%s317 + $0x8] sm:$0xff] %vm573, %v661
      %681 = vst.msk [vmem:[%s317 + $0x10] sm:$0xff] %vm573, %v666
      %682 = vst.msk [vmem:[%s317 + $0x18] sm:$0xff] %vm573, %v671
      %vm683 = vcmask 60416
      %684 = vst.msk [vmem:[%s317 + $0x20] sm:$0xf] %vm683, %v676
      %p685 = scmp.lt.s32.totalorder %s20, 1
      %s686 = scalar_select %p685, %s20, 1
      %p687 = scmp.lt.s32.totalorder %s21, 3
      %s688 = scalar_select %p687, %s21, 3
      %s689 = smul.addr %s688, 5
      %s690 = smul.addr %s686, 20
      %s691 = sadd.s32 %s689, %s690
      %s692 = smul.addr %s691, 8
      %s693 = scalar_lea.vmem %s5, %s692
      // Predicated region
      $region41: #{spp_forward.4} parent=39 // pred_check
        %p694 = pneg %p178
      $region42: #{spp_forward.4} parent=39 // pred_check_branch
        %696 = sbr.rel (%p694) target = $region44
      $region43: #{spp_forward.4} parent=39 // pred_region
        _
      $region44: #{spp_forward.4} parent=39 // pred_fallthru
        _
    $region40: #{spp_forward.4} parent=5 // pred_fallthru
      _
    %p697 = scmp.le.s32.totalorder 2, %s11
    // Predicated region
    $region45: #{spp_forward.4} parent=5 // pred_check
      %p698 = pneg %p697
    $region46: #{spp_forward.4} parent=5 // pred_check_branch
      %700 = sbr.rel (%p698) target = $region48
    $region47: #{spp_forward.4} parent=5 // pred_region
      %s701 = ssub.s32 %s11, 2
      // Predicated region
      $region49: #{spp_forward.4} parent=47 // pred_check
        %p702 = pneg %p184
      $region50: #{spp_forward.4} parent=47 // pred_check_branch
        %704 = sbr.rel (%p702) target = $region52
      $region51: #{spp_forward.4} parent=47 // pred_region
        %p705 = scmp.lt.s32.totalorder %s22, 1
        %s706 = scalar_select %p705, %s22, 1
        %p707 = scmp.lt.s32.totalorder %s23, 3
        %s708 = scalar_select %p707, %s23, 3
        %s709 = smul.addr %s708, 5
        %s710 = smul.addr %s706, 20
        %s711 = sadd.s32 %s709, %s710
        %s712 = smul.addr %s711, 8
        %s713 = scalar_lea.vmem %s5, %s712
      $region52: #{spp_forward.4} parent=47 // pred_fallthru
        _
    $region48: #{spp_forward.4} parent=5 // pred_fallthru
      _
  $region6: #{spp_forward.4} parent=0 // loop_footer
    %s15 = sadd.s32 1, %s11
  $region7: #{spp_forward.4} parent=0 // loop_footer_branch
    %10 = sbr.rel target = $region3
  $region8: #{spp_forward.4} parent=0 // loop_exit
    _

// kernel: spp_forward.3
$region0: #{spp_forward.3}
  #allocation0 [shape = 'u32[]', space=smem, size = 0x4, offset = 0x4, fixed_abs, tag = 'smem constant byte address 0x4 - core index']
  #allocation1 [shape = 'u32[144,128]{1,0:T(1,128)}', space=vmem, size = 0x12000, scoped, tag = 'internal scratch']
  %s0 = inlined_call_operand.hbm [shape: f32[512,32], index: 0, kind: input, shape index: {}]
  %s1 = inlined_call_operand.vmem [shape: f32[32,32], index: 1, kind: input, shape index: {}]
  %s2 = inlined_call_operand.vmem [shape: f32[1,32], index: 2, kind: input, shape index: {}]
  %s3 = inlined_call_operand.vmem [shape: f32[512,32], index: 3, kind: output, shape index: {}]
  %s4 = sld [smem:[#allocation0]]
  $region26: #{spp_forward.3} parent=0
    _
  %s6 = ssub.s32 1, %s4
  %s7 = scalar_select 0, %s6, %s4
  $region1: #{spp_forward.3} parent=0
    #allocation2 [shape = 'u8[262144]{0}', space=vmem, size = 0x40000, scoped, tag = 'input window, operand 0, single buffered']
    #allocation3 [shape = 's32[1]{0}', space=sflag, size = 0x4, scoped, tag = 'scoped memory for spp_forward.3']
    %8 = vsyncpa [#allocation3], 0
    // Predicated region
    $region2: #{spp_forward.3} parent=1 // pred_check
      _
    $region3: #{spp_forward.3} parent=1 // pred_check_branch
      %10 = sbr.rel (0) target = $region5
    $region4: #{spp_forward.3} parent=1 // pred_region
      %s12 = ssub.s32 8192, 8192
      %13 = vsyncadd [#allocation3], %s12
      %s14 = sshll.u32 [#allocation2], 4
      %s15 = int_to_ptr.vmem [resolvable:$true] %s14
      %20 = dma.hbm_to_vmem [thread:$0]  %s0, 8192, %s15, [#allocation3], 128, 128, 8
    $region5: #{spp_forward.3} parent=1 // pred_fallthru
      _
    // Predicated region
    $region6: #{spp_forward.3} parent=1 // pred_check
      _
    $region7: #{spp_forward.3} parent=1 // pred_check_branch
      %22 = sbr.rel (0) target = $region9
    $region8: #{spp_forward.3} parent=1 // pred_region
      _
    $region9: #{spp_forward.3} parent=1 // pred_fallthru
      _
    // Predicated region
    $region10: #{spp_forward.3} parent=1 // pred_check
      _
    $region11: #{spp_forward.3} parent=1 // pred_check_branch
      %24 = sbr.rel (0) target = $region13
    $region12: #{spp_forward.3} parent=1 // pred_region
      _
    $region13: #{spp_forward.3} parent=1 // pred_fallthru
      _
    // Predicated region
    $region14: #{spp_forward.3} parent=1 // pred_check
      _
    $region15: #{spp_forward.3} parent=1 // pred_check_branch
      %26 = sbr.rel (0) target = $region17
    $region16: #{spp_forward.3} parent=1 // pred_region
      %27 = dma.done [#allocation3], 8192
    $region17: #{spp_forward.3} parent=1 // pred_fallthru
      _
    %v28 = vld [vmem:[#allocation2] sm:$0xff]
    %v29 = vld [vmem:[#allocation2 + $0x8] sm:$0xff]
    %v30 = vld [vmem:[#allocation2 + $0x10] sm:$0xff]
    %v31 = vld [vmem:[#allocation2 + $0x18] sm:$0xff]
    %v32 = vld [vmem:[#allocation2 + $0x20] sm:$0xff]
    %v33 = vld [vmem:[#allocation2 + $0x28] sm:$0xff]
    %v34 = vld [vmem:[#allocation2 + $0x30] sm:$0xff]
    %v35 = vld [vmem:[#allocation2 + $0x38] sm:$0xff]
    %v36 = vld [vmem:[#allocation2 + $0x40] sm:$0xff]
    %v37 = vld [vmem:[#allocation2 + $0x48] sm:$0xff]
    %v38 = vld [vmem:[#allocation2 + $0x50] sm:$0xff]
    %v39 = vld [vmem:[#allocation2 + $0x58] sm:$0xff]
    %v40 = vld [vmem:[#allocation2 + $0x60] sm:$0xff]
    %v41 = vld [vmem:[#allocation2 + $0x68] sm:$0xff]
    %v42 = vld [vmem:[#allocation2 + $0x70] sm:$0xff]
    %v43 = vld [vmem:[#allocation2 + $0x78] sm:$0xff]
    %v44 = vld [vmem:[#allocation2 + $0x80] sm:$0xff]
    %v45 = vld [vmem:[#allocation2 + $0x88] sm:$0xff]
    %v46 = vld [vmem:[#allocation2 + $0x90] sm:$0xff]
    %v47 = vld [vmem:[#allocation2 + $0x98] sm:$0xff]
    %v48 = vld [vmem:[#allocation2 + $0xa0] sm:$0xff]
    %v49 = vld [vmem:[#allocation2 + $0xa8] sm:$0xff]
    %v50 = vld [vmem:[#allocation2 + $0xb0] sm:$0xff]
    %v51 = vld [vmem:[#allocation2 + $0xb8] sm:$0xff]
    %v52 = vld [vmem:[#allocation2 + $0xc0] sm:$0xff]
    %v53 = vld [vmem:[#allocation2 + $0xc8] sm:$0xff]
    %v54 = vld [vmem:[#allocation2 + $0xd0] sm:$0xff]
    %v55 = vld [vmem:[#allocation2 + $0xd8] sm:$0xff]
    %v56 = vld [vmem:[#allocation2 + $0xe0] sm:$0xff]
    %v57 = vld [vmem:[#allocation2 + $0xe8] sm:$0xff]
    %v58 = vld [vmem:[#allocation2 + $0xf0] sm:$0xff]
    %v59 = vld [vmem:[#allocation2 + $0xf8] sm:$0xff]
    %v60 = vld [vmem:[#allocation2 + $0x100] sm:$0xff]
    %v61 = vld [vmem:[#allocation2 + $0x108] sm:$0xff]
    %v62 = vld [vmem:[#allocation2 + $0x110] sm:$0xff]
    %v63 = vld [vmem:[#allocation2 + $0x118] sm:$0xff]
    %v64 = vld [vmem:[#allocation2 + $0x120] sm:$0xff]
    %v65 = vld [vmem:[#allocation2 + $0x128] sm:$0xff]
    %v66 = vld [vmem:[#allocation2 + $0x130] sm:$0xff]
    %v67 = vld [vmem:[#allocation2 + $0x138] sm:$0xff]
    %v68 = vld [vmem:[#allocation2 + $0x140] sm:$0xff]
    %v69 = vld [vmem:[#allocation2 + $0x148] sm:$0xff]
    %v70 = vld [vmem:[#allocation2 + $0x150] sm:$0xff]
    %v71 = vld [vmem:[#allocation2 + $0x158] sm:$0xff]
    %v72 = vld [vmem:[#allocation2 + $0x160] sm:$0xff]
    %v73 = vld [vmem:[#allocation2 + $0x168] sm:$0xff]
    %v74 = vld [vmem:[#allocation2 + $0x170] sm:$0xff]
    %v75 = vld [vmem:[#allocation2 + $0x178] sm:$0xff]
    %v76 = vld [vmem:[#allocation2 + $0x180] sm:$0xff]
    %v77 = vld [vmem:[#allocation2 + $0x188] sm:$0xff]
    %v78 = vld [vmem:[#allocation2 + $0x190] sm:$0xff]
    %v79 = vld [vmem:[#allocation2 + $0x198] sm:$0xff]
    %v80 = vld [vmem:[#allocation2 + $0x1a0] sm:$0xff]
    %v81 = vld [vmem:[#allocation2 + $0x1a8] sm:$0xff]
    %v82 = vld [vmem:[#allocation2 + $0x1b0] sm:$0xff]
    %v83 = vld [vmem:[#allocation2 + $0x1b8] sm:$0xff]
    %v84 = vld [vmem:[#allocation2 + $0x1c0] sm:$0xff]
    %v85 = vld [vmem:[#allocation2 + $0x1c8] sm:$0xff]
    %v86 = vld [vmem:[#allocation2 + $0x1d0] sm:$0xff]
    %v87 = vld [vmem:[#allocation2 + $0x1d8] sm:$0xff]
    %v88 = vld [vmem:[#allocation2 + $0x1e0] sm:$0xff]
    %v89 = vld [vmem:[#allocation2 + $0x1e8] sm:$0xff]
    %v90 = vld [vmem:[#allocation2 + $0x1f0] sm:$0xff]
    %v91 = vld [vmem:[#allocation2 + $0x1f8] sm:$0xff]
    %v92 = vld [vmem:[%s1] sm:$0xff]
    %v93 = vld [vmem:[%s1 + $0x8] sm:$0xff]
    %v94 = vld [vmem:[%s1 + $0x10] sm:$0xff]
    %v95 = vld [vmem:[%s1 + $0x18] sm:$0xff]
    %v96 = vld [vmem:[%s2] sm:$0x1]
    %v98 = vlaneseq
    %v99 = vshrl.u32 %v98, 7
    %v100 = vsub.s32 0, %v99
    %v101 = vrot.slane %v96, %v100
    %vm103 = vcmask 261120
    %v105 = vsel %vm103, %v28, 0
    %v108 = vsel %vm103, %v29, 0
    %v111 = vsel %vm103, %v30, 0
    %v114 = vsel %vm103, %v31, 0
    %v117 = vsel %vm103, %v32, 0
    %v120 = vsel %vm103, %v33, 0
    %v123 = vsel %vm103, %v34, 0
    %v126 = vsel %vm103, %v35, 0
    %v129 = vsel %vm103, %v36, 0
    %v132 = vsel %vm103, %v37, 0
    %v135 = vsel %vm103, %v38, 0
    %v138 = vsel %vm103, %v39, 0
    %v141 = vsel %vm103, %v40, 0
    %v144 = vsel %vm103, %v41, 0
    %v147 = vsel %vm103, %v42, 0
    %v150 = vsel %vm103, %v43, 0
    %v153 = vsel %vm103, %v44, 0
    %v156 = vsel %vm103, %v45, 0
    %v159 = vsel %vm103, %v46, 0
    %v162 = vsel %vm103, %v47, 0
    %v165 = vsel %vm103, %v48, 0
    %v168 = vsel %vm103, %v49, 0
    %v171 = vsel %vm103, %v50, 0
    %v174 = vsel %vm103, %v51, 0
    %v177 = vsel %vm103, %v52, 0
    %v180 = vsel %vm103, %v53, 0
    %v183 = vsel %vm103, %v54, 0
    %v186 = vsel %vm103, %v55, 0
    %v189 = vsel %vm103, %v56, 0
    %v192 = vsel %vm103, %v57, 0
    %v195 = vsel %vm103, %v58, 0
    %v198 = vsel %vm103, %v59, 0
    %v201 = vsel %vm103, %v60, 0
    %v204 = vsel %vm103, %v61, 0
    %v207 = vsel %vm103, %v62, 0
    %v210 = vsel %vm103, %v63, 0
    %v213 = vsel %vm103, %v64, 0
    %v216 = vsel %vm103, %v65, 0
    %v219 = vsel %vm103, %v66, 0
    %v222 = vsel %vm103, %v67, 0
    %v225 = vsel %vm103, %v68, 0
    %v228 = vsel %vm103, %v69, 0
    %v231 = vsel %vm103, %v70, 0
    %v234 = vsel %vm103, %v71, 0
    %v237 = vsel %vm103, %v72, 0
    %v240 = vsel %vm103, %v73, 0
    %v243 = vsel %vm103, %v74, 0
    %v246 = vsel %vm103, %v75, 0
    %v249 = vsel %vm103, %v76, 0
    %v252 = vsel %vm103, %v77, 0
    %v255 = vsel %vm103, %v78, 0
    %v258 = vsel %vm103, %v79, 0
    %v261 = vsel %vm103, %v80, 0
    %v264 = vsel %vm103, %v81, 0
    %v267 = vsel %vm103, %v82, 0
    %v270 = vsel %vm103, %v83, 0
    %v273 = vsel %vm103, %v84, 0
    %v276 = vsel %vm103, %v85, 0
    %v279 = vsel %vm103, %v86, 0
    %v282 = vsel %vm103, %v87, 0
    %v285 = vsel %vm103, %v88, 0
    %v288 = vsel %vm103, %v89, 0
    %v291 = vsel %vm103, %v90, 0
    %v294 = vsel %vm103, %v91, 0
    %296 = vmatprep.subr.mxu0 0.0
    %297 = vmatpush1.msra.mxu0 0.0
    %298 = vmatprep.subr.mxu0 0.0
    %299 = vmatpush1.msra.mxu0 0.0
    %300 = vmatprep.subr.mxu0 0.0
    %301 = vmatpush1.msra.mxu0 0.0
    %302 = vmatprep.subr.mxu0 0.0
    %303 = vmatpush1.msra.mxu0 0.0
    %304 = vmatprep.subr.mxu0 0.0
    %305 = vmatpush1.msra.mxu0 0.0
    %306 = vmatprep.subr.mxu0 0.0
    %307 = vmatpush1.msra.mxu0 0.0
    %308 = vmatprep.subr.mxu0 0.0
    %309 = vmatpush1.msra.mxu0 0.0
    %310 = vmatprep.subr.mxu0 0.0
    %311 = vmatpush1.msra.mxu0 0.0
    %312 = vmatprep.subr.mxu0 0.0
    %313 = vmatpush1.msra.mxu0 0.0
    %314 = vmatprep.subr.mxu0 0.0
    %315 = vmatpush1.msra.mxu0 0.0
    %316 = vmatprep.subr.mxu0 0.0
    %317 = vmatpush1.msra.mxu0 0.0
    %318 = vmatprep.subr.mxu0 0.0
    %319 = vmatpush1.msra.mxu0 0.0
    %320 = vmatprep.subr.mxu0 0.0
    %321 = vmatpush1.msra.mxu0 %v95
    %322 = vmatprep.subr.mxu0 0.0
    %323 = vmatpush1.msra.mxu0 %v94
    %324 = vmatprep.subr.mxu0 0.0
    %325 = vmatpush1.msra.mxu0 %v93
    %326 = vmatprep.subr.mxu0 0.0
    %327 = vmatpush1.msra.mxu0 %v92
    %328 = vmatprep.subr.mxu0 0.0
    %329 = vmatpush2.msra.mxu0 0.0
    %330 = vmatprep.subr.mxu0 0.0
    %331 = vmatpush2.msra.mxu0 0.0
    %332 = vmatprep.subr.mxu0 0.0
    %333 = vmatpush2.msra.mxu0 0.0
    %334 = vmatprep.subr.mxu0 0.0
    %335 = vmatpush2.msra.mxu0 0.0
    %336 = vmatprep.subr.mxu0 0.0
    %337 = vmatpush2.msra.mxu0 0.0
    %338 = vmatprep.subr.mxu0 0.0
    %339 = vmatpush2.msra.mxu0 0.0
    %340 = vmatprep.subr.mxu0 0.0
    %341 = vmatpush2.msra.mxu0 0.0
    %342 = vmatprep.subr.mxu0 0.0
    %343 = vmatpush2.msra.mxu0 0.0
    %344 = vmatprep.subr.mxu0 0.0
    %345 = vmatpush2.msra.mxu0 0.0
    %346 = vmatprep.subr.mxu0 0.0
    %347 = vmatpush2.msra.mxu0 0.0
    %348 = vmatprep.subr.mxu0 0.0
    %349 = vmatpush2.msra.mxu0 0.0
    %350 = vmatprep.subr.mxu0 0.0
    %351 = vmatpush2.msra.mxu0 0.0
    %352 = vmatprep.subr.mxu0 0.0
    %353 = vmatpush2.msra.mxu0 0.0
    %354 = vmatprep.subr.mxu0 0.0
    %355 = vmatpush2.msra.mxu0 0.0
    %356 = vmatprep.subr.mxu0 0.0
    %357 = vmatpush2.msra.mxu0 0.0
    %358 = vmatprep.subr.mxu0 0.0
    %359 = vmatpush2.msra.mxu0 0.0
    %360 = vmatprep.mubr.f32.mxu0 0.0
    %361 = vmatmul.mubr.f32.gmra.mxu0 %v105
    %v362 = vpop.f32.mrf.mxu0
    %v363 = vadd.f32 %v101, %v362
    %v364 = vpop.f32.mrf.mxu0
    %365 = vmatprep.mubr.f32.mxu0 0.0
    %366 = vmatmul.mubr.f32.gmra.mxu0 %v108
    %v367 = vpop.f32.mrf.mxu0
    %v368 = vadd.f32 %v101, %v367
    %v369 = vpop.f32.mrf.mxu0
    %370 = vmatprep.mubr.f32.mxu0 0.0
    %371 = vmatmul.mubr.f32.gmra.mxu0 %v111
    %v372 = vpop.f32.mrf.mxu0
    %v373 = vadd.f32 %v101, %v372
    %v374 = vpop.f32.mrf.mxu0
    %375 = vmatprep.mubr.f32.mxu0 0.0
    %376 = vmatmul.mubr.f32.gmra.mxu0 %v114
    %v377 = vpop.f32.mrf.mxu0
    %v378 = vadd.f32 %v101, %v377
    %v379 = vpop.f32.mrf.mxu0
    %380 = vmatprep.mubr.f32.mxu0 0.0
    %381 = vmatmul.mubr.f32.gmra.mxu0 %v117
    %v382 = vpop.f32.mrf.mxu0
    %v383 = vadd.f32 %v101, %v382
    %v384 = vpop.f32.mrf.mxu0
    %385 = vmatprep.mubr.f32.mxu0 0.0
    %386 = vmatmul.mubr.f32.gmra.mxu0 %v120
    %v387 = vpop.f32.mrf.mxu0
    %v388 = vadd.f32 %v101, %v387
    %v389 = vpop.f32.mrf.mxu0
    %390 = vmatprep.mubr.f32.mxu0 0.0
    %391 = vmatmul.mubr.f32.gmra.mxu0 %v123
    %v392 = vpop.f32.mrf.mxu0
    %v393 = vadd.f32 %v101, %v392
    %v394 = vpop.f32.mrf.mxu0
    %395 = vmatprep.mubr.f32.mxu0 0.0
    %396 = vmatmul.mubr.f32.gmra.mxu0 %v126
    %v397 = vpop.f32.mrf.mxu0
    %v398 = vadd.f32 %v101, %v397
    %v399 = vpop.f32.mrf.mxu0
    %400 = vmatprep.mubr.f32.mxu0 0.0
    %401 = vmatmul.mubr.f32.gmra.mxu0 %v129
    %v402 = vpop.f32.mrf.mxu0
    %v403 = vadd.f32 %v101, %v402
    %v404 = vpop.f32.mrf.mxu0
    %405 = vmatprep.mubr.f32.mxu0 0.0
    %406 = vmatmul.mubr.f32.gmra.mxu0 %v132
    %v407 = vpop.f32.mrf.mxu0
    %v408 = vadd.f32 %v101, %v407
    %v409 = vpop.f32.mrf.mxu0
    %410 = vmatprep.mubr.f32.mxu0 0.0
    %411 = vmatmul.mubr.f32.gmra.mxu0 %v135
    %v412 = vpop.f32.mrf.mxu0
    %v413 = vadd.f32 %v101, %v412
    %v414 = vpop.f32.mrf.mxu0
    %415 = vmatprep.mubr.f32.mxu0 0.0
    %416 = vmatmul.mubr.f32.gmra.mxu0 %v138
    %v417 = vpop.f32.mrf.mxu0
    %v418 = vadd.f32 %v101, %v417
    %v419 = vpop.f32.mrf.mxu0
    %420 = vmatprep.mubr.f32.mxu0 0.0
    %421 = vmatmul.mubr.f32.gmra.mxu0 %v141
    %v422 = vpop.f32.mrf.mxu0
    %v423 = vadd.f32 %v101, %v422
    %v424 = vpop.f32.mrf.mxu0
    %425 = vmatprep.mubr.f32.mxu0 0.0
    %426 = vmatmul.mubr.f32.gmra.mxu0 %v144
    %v427 = vpop.f32.mrf.mxu0
    %v428 = vadd.f32 %v101, %v427
    %v429 = vpop.f32.mrf.mxu0
    %430 = vmatprep.mubr.f32.mxu0 0.0
    %431 = vmatmul.mubr.f32.gmra.mxu0 %v147
    %v432 = vpop.f32.mrf.mxu0
    %v433 = vadd.f32 %v101, %v432
    %v434 = vpop.f32.mrf.mxu0
    %435 = vmatprep.mubr.f32.mxu0 0.0
    %436 = vmatmul.mubr.f32.gmra.mxu0 %v150
    %v437 = vpop.f32.mrf.mxu0
    %v438 = vadd.f32 %v101, %v437
    %v439 = vpop.f32.mrf.mxu0
    %440 = vmatprep.mubr.f32.mxu0 0.0
    %441 = vmatmul.mubr.f32.gmra.mxu0 %v153
    %v442 = vpop.f32.mrf.mxu0
    %v443 = vadd.f32 %v101, %v442
    %v444 = vpop.f32.mrf.mxu0
    %445 = vmatprep.mubr.f32.mxu0 0.0
    %446 = vmatmul.mubr.f32.gmra.mxu0 %v156
    %v447 = vpop.f32.mrf.mxu0
    %v448 = vadd.f32 %v101, %v447
    %v449 = vpop.f32.mrf.mxu0
    %450 = vmatprep.mubr.f32.mxu0 0.0
    %451 = vmatmul.mubr.f32.gmra.mxu0 %v159
    %v452 = vpop.f32.mrf.mxu0
    %v453 = vadd.f32 %v101, %v452
    %v454 = vpop.f32.mrf.mxu0
    %455 = vmatprep.mubr.f32.mxu0 0.0
    %456 = vmatmul.mubr.f32.gmra.mxu0 %v162
    %v457 = vpop.f32.mrf.mxu0
    %v458 = vadd.f32 %v101, %v457
    %v459 = vpop.f32.mrf.mxu0
    %460 = vmatprep.mubr.f32.mxu0 0.0
    %461 = vmatmul.mubr.f32.gmra.mxu0 %v165
    %v462 = vpop.f32.mrf.mxu0
    %v463 = vadd.f32 %v101, %v462
    %v464 = vpop.f32.mrf.mxu0
    %465 = vmatprep.mubr.f32.mxu0 0.0
    %466 = vmatmul.mubr.f32.gmra.mxu0 %v168
    %v467 = vpop.f32.mrf.mxu0
    %v468 = vadd.f32 %v101, %v467
    %v469 = vpop.f32.mrf.mxu0
    %470 = vmatprep.mubr.f32.mxu0 0.0
    %471 = vmatmul.mubr.f32.gmra.mxu0 %v171
    %v472 = vpop.f32.mrf.mxu0
    %v473 = vadd.f32 %v101, %v472
    %v474 = vpop.f32.mrf.mxu0
    %475 = vmatprep.mubr.f32.mxu0 0.0
    %476 = vmatmul.mubr.f32.gmra.mxu0 %v174
    %v477 = vpop.f32.mrf.mxu0
    %v478 = vadd.f32 %v101, %v477
    %v479 = vpop.f32.mrf.mxu0
    %480 = vmatprep.mubr.f32.mxu0 0.0
    %481 = vmatmul.mubr.f32.gmra.mxu0 %v177
    %v482 = vpop.f32.mrf.mxu0
    %v483 = vadd.f32 %v101, %v482
    %v484 = vpop.f32.mrf.mxu0
    %485 = vmatprep.mubr.f32.mxu0 0.0
    %486 = vmatmul.mubr.f32.gmra.mxu0 %v180
    %v487 = vpop.f32.mrf.mxu0
    %v488 = vadd.f32 %v101, %v487
    %v489 = vpop.f32.mrf.mxu0
    %490 = vmatprep.mubr.f32.mxu0 0.0
    %491 = vmatmul.mubr.f32.gmra.mxu0 %v183
    %v492 = vpop.f32.mrf.mxu0
    %v493 = vadd.f32 %v101, %v492
    %v494 = vpop.f32.mrf.mxu0
    %495 = vmatprep.mubr.f32.mxu0 0.0
    %496 = vmatmul.mubr.f32.gmra.mxu0 %v186
    %v497 = vpop.f32.mrf.mxu0
    %v498 = vadd.f32 %v101, %v497
    %v499 = vpop.f32.mrf.mxu0
    %500 = vmatprep.mubr.f32.mxu0 0.0
    %501 = vmatmul.mubr.f32.gmra.mxu0 %v189
    %v502 = vpop.f32.mrf.mxu0
    %v503 = vadd.f32 %v101, %v502
    %v504 = vpop.f32.mrf.mxu0
    %505 = vmatprep.mubr.f32.mxu0 0.0
    %506 = vmatmul.mubr.f32.gmra.mxu0 %v192
    %v507 = vpop.f32.mrf.mxu0
    %v508 = vadd.f32 %v101, %v507
    %v509 = vpop.f32.mrf.mxu0
    %510 = vmatprep.mubr.f32.mxu0 0.0
    %511 = vmatmul.mubr.f32.gmra.mxu0 %v195
    %v512 = vpop.f32.mrf.mxu0
    %v513 = vadd.f32 %v101, %v512
    %v514 = vpop.f32.mrf.mxu0
    %515 = vmatprep.mubr.f32.mxu0 0.0
    %516 = vmatmul.mubr.f32.gmra.mxu0 %v198
    %v517 = vpop.f32.mrf.mxu0
    %v518 = vadd.f32 %v101, %v517
    %v519 = vpop.f32.mrf.mxu0
    %520 = vmatprep.mubr.f32.mxu0 0.0
    %521 = vmatmul.mubr.f32.gmra.mxu0 %v201
    %v522 = vpop.f32.mrf.mxu0
    %v523 = vadd.f32 %v101, %v522
    %v524 = vpop.f32.mrf.mxu0
    %525 = vmatprep.mubr.f32.mxu0 0.0
    %526 = vmatmul.mubr.f32.gmra.mxu0 %v204
    %v527 = vpop.f32.mrf.mxu0
    %v528 = vadd.f32 %v101, %v527
    %v529 = vpop.f32.mrf.mxu0
    %530 = vmatprep.mubr.f32.mxu0 0.0
    %531 = vmatmul.mubr.f32.gmra.mxu0 %v207
    %v532 = vpop.f32.mrf.mxu0
    %v533 = vadd.f32 %v101, %v532
    %v534 = vpop.f32.mrf.mxu0
    %535 = vmatprep.mubr.f32.mxu0 0.0
    %536 = vmatmul.mubr.f32.gmra.mxu0 %v210
    %v537 = vpop.f32.mrf.mxu0
    %v538 = vadd.f32 %v101, %v537
    %v539 = vpop.f32.mrf.mxu0
    %540 = vmatprep.mubr.f32.mxu0 0.0
    %541 = vmatmul.mubr.f32.gmra.mxu0 %v213
    %v542 = vpop.f32.mrf.mxu0
    %v543 = vadd.f32 %v101, %v542
    %v544 = vpop.f32.mrf.mxu0
    %545 = vmatprep.mubr.f32.mxu0 0.0
    %546 = vmatmul.mubr.f32.gmra.mxu0 %v216
    %v547 = vpop.f32.mrf.mxu0
    %v548 = vadd.f32 %v101, %v547
    %v549 = vpop.f32.mrf.mxu0
    %550 = vmatprep.mubr.f32.mxu0 0.0
    %551 = vmatmul.mubr.f32.gmra.mxu0 %v219
    %v552 = vpop.f32.mrf.mxu0
    %v553 = vadd.f32 %v101, %v552
    %v554 = vpop.f32.mrf.mxu0
    %555 = vmatprep.mubr.f32.mxu0 0.0
    %556 = vmatmul.mubr.f32.gmra.mxu0 %v222
    %v557 = vpop.f32.mrf.mxu0
    %v558 = vadd.f32 %v101, %v557
    %v559 = vpop.f32.mrf.mxu0
    %560 = vmatprep.mubr.f32.mxu0 0.0
    %561 = vmatmul.mubr.f32.gmra.mxu0 %v225
    %v562 = vpop.f32.mrf.mxu0
    %v563 = vadd.f32 %v101, %v562
    %v564 = vpop.f32.mrf.mxu0
    %565 = vmatprep.mubr.f32.mxu0 0.0
    %566 = vmatmul.mubr.f32.gmra.mxu0 %v228
    %v567 = vpop.f32.mrf.mxu0
    %v568 = vadd.f32 %v101, %v567
    %v569 = vpop.f32.mrf.mxu0
    %570 = vmatprep.mubr.f32.mxu0 0.0
    %571 = vmatmul.mubr.f32.gmra.mxu0 %v231
    %v572 = vpop.f32.mrf.mxu0
    %v573 = vadd.f32 %v101, %v572
    %v574 = vpop.f32.mrf.mxu0
    %575 = vmatprep.mubr.f32.mxu0 0.0
    %576 = vmatmul.mubr.f32.gmra.mxu0 %v234
    %v577 = vpop.f32.mrf.mxu0
    %v578 = vadd.f32 %v101, %v577
    %v579 = vpop.f32.mrf.mxu0
    %580 = vmatprep.mubr.f32.mxu0 0.0
    %581 = vmatmul.mubr.f32.gmra.mxu0 %v237
    %v582 = vpop.f32.mrf.mxu0
    %v583 = vadd.f32 %v101, %v582
    %v584 = vpop.f32.mrf.mxu0
    %585 = vmatprep.mubr.f32.mxu0 0.0
    %586 = vmatmul.mubr.f32.gmra.mxu0 %v240
    %v587 = vpop.f32.mrf.mxu0
    %v588 = vadd.f32 %v101, %v587
    %v589 = vpop.f32.mrf.mxu0
    %590 = vmatprep.mubr.f32.mxu0 0.0
    %591 = vmatmul.mubr.f32.gmra.mxu0 %v243
    %v592 = vpop.f32.mrf.mxu0
    %v593 = vadd.f32 %v101, %v592
    %v594 = vpop.f32.mrf.mxu0
    %595 = vmatprep.mubr.f32.mxu0 0.0
    %596 = vmatmul.mubr.f32.gmra.mxu0 %v246
    %v597 = vpop.f32.mrf.mxu0
    %v598 = vadd.f32 %v101, %v597
    %v599 = vpop.f32.mrf.mxu0
    %600 = vmatprep.mubr.f32.mxu0 0.0
    %601 = vmatmul.mubr.f32.gmra.mxu0 %v249
    %v602 = vpop.f32.mrf.mxu0
    %v603 = vadd.f32 %v101, %v602
    %v604 = vpop.f32.mrf.mxu0
    %605 = vmatprep.mubr.f32.mxu0 0.0
    %606 = vmatmul.mubr.f32.gmra.mxu0 %v252
    %v607 = vpop.f32.mrf.mxu0
    %v608 = vadd.f32 %v101, %v607
    %v609 = vpop.f32.mrf.mxu0
    %610 = vmatprep.mubr.f32.mxu0 0.0
    %611 = vmatmul.mubr.f32.gmra.mxu0 %v255
    %v612 = vpop.f32.mrf.mxu0
    %v613 = vadd.f32 %v101, %v612
    %v614 = vpop.f32.mrf.mxu0
    %615 = vmatprep.mubr.f32.mxu0 0.0
    %616 = vmatmul.mubr.f32.gmra.mxu0 %v258
    %v617 = vpop.f32.mrf.mxu0
    %v618 = vadd.f32 %v101, %v617
    %v619 = vpop.f32.mrf.mxu0
    %620 = vmatprep.mubr.f32.mxu0 0.0
    %621 = vmatmul.mubr.f32.gmra.mxu0 %v261
    %v622 = vpop.f32.mrf.mxu0
    %v623 = vadd.f32 %v101, %v622
    %v624 = vpop.f32.mrf.mxu0
    %625 = vmatprep.mubr.f32.mxu0 0.0
    %626 = vmatmul.mubr.f32.gmra.mxu0 %v264
    %v627 = vpop.f32.mrf.mxu0
    %v628 = vadd.f32 %v101, %v627
    %v629 = vpop.f32.mrf.mxu0
    %630 = vmatprep.mubr.f32.mxu0 0.0
    %631 = vmatmul.mubr.f32.gmra.mxu0 %v267
    %v632 = vpop.f32.mrf.mxu0
    %v633 = vadd.f32 %v101, %v632
    %v634 = vpop.f32.mrf.mxu0
    %635 = vmatprep.mubr.f32.mxu0 0.0
    %636 = vmatmul.mubr.f32.gmra.mxu0 %v270
    %v637 = vpop.f32.mrf.mxu0
    %v638 = vadd.f32 %v101, %v637
    %v639 = vpop.f32.mrf.mxu0
    %640 = vmatprep.mubr.f32.mxu0 0.0
    %641 = vmatmul.mubr.f32.gmra.mxu0 %v273
    %v642 = vpop.f32.mrf.mxu0
    %v643 = vadd.f32 %v101, %v642
    %v644 = vpop.f32.mrf.mxu0
    %645 = vmatprep.mubr.f32.mxu0 0.0
    %646 = vmatmul.mubr.f32.gmra.mxu0 %v276
    %v647 = vpop.f32.mrf.mxu0
    %v648 = vadd.f32 %v101, %v647
    %v649 = vpop.f32.mrf.mxu0
    %650 = vmatprep.mubr.f32.mxu0 0.0
    %651 = vmatmul.mubr.f32.gmra.mxu0 %v279
    %v652 = vpop.f32.mrf.mxu0
    %v653 = vadd.f32 %v101, %v652
    %v654 = vpop.f32.mrf.mxu0
    %655 = vmatprep.mubr.f32.mxu0 0.0
    %656 = vmatmul.mubr.f32.gmra.mxu0 %v282
    %v657 = vpop.f32.mrf.mxu0
    %v658 = vadd.f32 %v101, %v657
    %v659 = vpop.f32.mrf.mxu0
    %660 = vmatprep.mubr.f32.mxu0 0.0
    %661 = vmatmul.mubr.f32.gmra.mxu0 %v285
    %v662 = vpop.f32.mrf.mxu0
    %v663 = vadd.f32 %v101, %v662
    %v664 = vpop.f32.mrf.mxu0
    %665 = vmatprep.mubr.f32.mxu0 0.0
    %666 = vmatmul.mubr.f32.gmra.mxu0 %v288
    %v667 = vpop.f32.mrf.mxu0
    %v668 = vadd.f32 %v101, %v667
    %v669 = vpop.f32.mrf.mxu0
    %670 = vmatprep.mubr.f32.mxu0 0.0
    %671 = vmatmul.mubr.f32.gmra.mxu0 %v291
    %v672 = vpop.f32.mrf.mxu0
    %v673 = vadd.f32 %v101, %v672
    %v674 = vpop.f32.mrf.mxu0
    %675 = vmatprep.mubr.f32.mxu0 0.0
    %676 = vmatmul.mubr.f32.gmra.mxu0 %v294
    %v677 = vpop.f32.mrf.mxu0
    %v678 = vadd.f32 %v101, %v677
    %v679 = vpop.f32.mrf.mxu0
    %680 = vdwg.mxu0
    %v681 = vmax.f32 %v363, 0.0
    %v682 = vmax.f32 %v368, 0.0
    %v683 = vmax.f32 %v373, 0.0
    %v684 = vmax.f32 %v378, 0.0
    %v685 = vmax.f32 %v383, 0.0
    %v686 = vmax.f32 %v388, 0.0
    %v687 = vmax.f32 %v393, 0.0
    %v688 = vmax.f32 %v398, 0.0
    %v689 = vmax.f32 %v403, 0.0
    %v690 = vmax.f32 %v408, 0.0
    %v691 = vmax.f32 %v413, 0.0
    %v692 = vmax.f32 %v418, 0.0
    %v693 = vmax.f32 %v423, 0.0
    %v694 = vmax.f32 %v428, 0.0
    %v695 = vmax.f32 %v433, 0.0
    %v696 = vmax.f32 %v438, 0.0
    %v697 = vmax.f32 %v443, 0.0
    %v698 = vmax.f32 %v448, 0.0
    %v699 = vmax.f32 %v453, 0.0
    %v700 = vmax.f32 %v458, 0.0
    %v701 = vmax.f32 %v463, 0.0
    %v702 = vmax.f32 %v468, 0.0
    %v703 = vmax.f32 %v473, 0.0
    %v704 = vmax.f32 %v478, 0.0
    %v705 = vmax.f32 %v483, 0.0
    %v706 = vmax.f32 %v488, 0.0
    %v707 = vmax.f32 %v493, 0.0
    %v708 = vmax.f32 %v498, 0.0
    %v709 = vmax.f32 %v503, 0.0
    %v710 = vmax.f32 %v508, 0.0
    %v711 = vmax.f32 %v513, 0.0
    %v712 = vmax.f32 %v518, 0.0
    %v713 = vmax.f32 %v523, 0.0
    %v714 = vmax.f32 %v528, 0.0
    %v715 = vmax.f32 %v533, 0.0
    %v716 = vmax.f32 %v538, 0.0
    %v717 = vmax.f32 %v543, 0.0
    %v718 = vmax.f32 %v548, 0.0
    %v719 = vmax.f32 %v553, 0.0
    %v720 = vmax.f32 %v558, 0.0
    %v721 = vmax.f32 %v563, 0.0
    %v722 = vmax.f32 %v568, 0.0
    %v723 = vmax.f32 %v573, 0.0
    %v724 = vmax.f32 %v578, 0.0
    %v725 = vmax.f32 %v583, 0.0
    %v726 = vmax.f32 %v588, 0.0
    %v727 = vmax.f32 %v593, 0.0
    %v728 = vmax.f32 %v598, 0.0
    %v729 = vmax.f32 %v603, 0.0
    %v730 = vmax.f32 %v608, 0.0
    %v731 = vmax.f32 %v613, 0.0
    %v732 = vmax.f32 %v618, 0.0
    %v733 = vmax.f32 %v623, 0.0
    %v734 = vmax.f32 %v628, 0.0
    %v735 = vmax.f32 %v633, 0.0
    %v736 = vmax.f32 %v638, 0.0
    %v737 = vmax.f32 %v643, 0.0
    %v738 = vmax.f32 %v648, 0.0
    %v739 = vmax.f32 %v653, 0.0
    %v740 = vmax.f32 %v658, 0.0
    %v741 = vmax.f32 %v663, 0.0
    %v742 = vmax.f32 %v668, 0.0
    %v743 = vmax.f32 %v673, 0.0
    %v744 = vmax.f32 %v678, 0.0
    %745 = vst.msk [vmem:[%s3] sm:$0xff] %vm103, %v681
    %746 = vst.msk [vmem:[%s3 + $0x8] sm:$0xff] %vm103, %v682
    %747 = vst.msk [vmem:[%s3 + $0x10] sm:$0xff] %vm103, %v683
    %748 = vst.msk [vmem:[%s3 + $0x18] sm:$0xff] %vm103, %v684
    %749 = vst.msk [vmem:[%s3 + $0x20] sm:$0xff] %vm103, %v685
    %750 = vst.msk [vmem:[%s3 + $0x28] sm:$0xff] %vm103, %v686
    %751 = vst.msk [vmem:[%s3 + $0x30] sm:$0xff] %vm103, %v687
    %752 = vst.msk [vmem:[%s3 + $0x38] sm:$0xff] %vm103, %v688
    %753 = vst.msk [vmem:[%s3 + $0x40] sm:$0xff] %vm103, %v689
    %754 = vst.msk [vmem:[%s3 + $0x48] sm:$0xff] %vm103, %v690
    %755 = vst.msk [vmem:[%s3 + $0x50] sm:$0xff] %vm103, %v691
    %756 = vst.msk [vmem:[%s3 + $0x58] sm:$0xff] %vm103, %v692
    %757 = vst.msk [vmem:[%s3 + $0x60] sm:$0xff] %vm103, %v693
    %758 = vst.msk [vmem:[%s3 + $0x68] sm:$0xff] %vm103, %v694
    %759 = vst.msk [vmem:[%s3 + $0x70] sm:$0xff] %vm103, %v695
    %760 = vst.msk [vmem:[%s3 + $0x78] sm:$0xff] %vm103, %v696
    %761 = vst.msk [vmem:[%s3 + $0x80] sm:$0xff] %vm103, %v697
    %762 = vst.msk [vmem:[%s3 + $0x88] sm:$0xff] %vm103, %v698
    %763 = vst.msk [vmem:[%s3 + $0x90] sm:$0xff] %vm103, %v699
    %764 = vst.msk [vmem:[%s3 + $0x98] sm:$0xff] %vm103, %v700
    %765 = vst.msk [vmem:[%s3 + $0xa0] sm:$0xff] %vm103, %v701
    %766 = vst.msk [vmem:[%s3 + $0xa8] sm:$0xff] %vm103, %v702
    %767 = vst.msk [vmem:[%s3 + $0xb0] sm:$0xff] %vm103, %v703
    %768 = vst.msk [vmem:[%s3 + $0xb8] sm:$0xff] %vm103, %v704
    %769 = vst.msk [vmem:[%s3 + $0xc0] sm:$0xff] %vm103, %v705
    %770 = vst.msk [vmem:[%s3 + $0xc8] sm:$0xff] %vm103, %v706
    %771 = vst.msk [vmem:[%s3 + $0xd0] sm:$0xff] %vm103, %v707
    %772 = vst.msk [vmem:[%s3 + $0xd8] sm:$0xff] %vm103, %v708
    %773 = vst.msk [vmem:[%s3 + $0xe0] sm:$0xff] %vm103, %v709
    %774 = vst.msk [vmem:[%s3 + $0xe8] sm:$0xff] %vm103, %v710
    %775 = vst.msk [vmem:[%s3 + $0xf0] sm:$0xff] %vm103, %v711
    %776 = vst.msk [vmem:[%s3 + $0xf8] sm:$0xff] %vm103, %v712
    %777 = vst.msk [vmem:[%s3 + $0x100] sm:$0xff] %vm103, %v713
    %778 = vst.msk [vmem:[%s3 + $0x108] sm:$0xff] %vm103, %v714
    %779 = vst.msk [vmem:[%s3 + $0x110] sm:$0xff] %vm103, %v715
    %780 = vst.msk [vmem:[%s3 + $0x118] sm:$0xff] %vm103, %v716
    %781 = vst.msk [vmem:[%s3 + $0x120] sm:$0xff] %vm103, %v717
    %782 = vst.msk [vmem:[%s3 + $0x128] sm:$0xff] %vm103, %v718
    %783 = vst.msk [vmem:[%s3 + $0x130] sm:$0xff] %vm103, %v719
    %784 = vst.msk [vmem:[%s3 + $0x138] sm:$0xff] %vm103, %v720
    %785 = vst.msk [vmem:[%s3 + $0x140] sm:$0xff] %vm103, %v721
    %786 = vst.msk [vmem:[%s3 + $0x148] sm:$0xff] %vm103, %v722
    %787 = vst.msk [vmem:[%s3 + $0x150] sm:$0xff] %vm103, %v723
    %788 = vst.msk [vmem:[%s3 + $0x158] sm:$0xff] %vm103, %v724
    %789 = vst.msk [vmem:[%s3 + $0x160] sm:$0xff] %vm103, %v725
    %790 = vst.msk [vmem:[%s3 + $0x168] sm:$0xff] %vm103, %v726
    %791 = vst.msk [vmem:[%s3 + $0x170] sm:$0xff] %vm103, %v727
    %792 = vst.msk [vmem:[%s3 + $0x178] sm:$0xff] %vm103, %v728
    %793 = vst.msk [vmem:[%s3 + $0x180] sm:$0xff] %vm103, %v729
    %794 = vst.msk [vmem:[%s3 + $0x188] sm:$0xff] %vm103, %v730
    %795 = vst.msk [vmem:[%s3 + $0x190] sm:$0xff] %vm103, %v731
    %796 = vst.msk [vmem:[%s3 + $0x198] sm:$0xff] %vm103, %v732
    %797 = vst.msk [vmem:[%s3 + $0x1a0] sm:$0xff] %vm103, %v733
    %798 = vst.msk [vmem:[%s3 + $0x1a8] sm:$0xff] %vm103, %v734
    %799 = vst.msk [vmem:[%s3 + $0x1b0] sm:$0xff] %vm103, %v735
    %800 = vst.msk [vmem:[%s3 + $0x1b8] sm:$0xff] %vm103, %v736
    %801 = vst.msk [vmem:[%s3 + $0x1c0] sm:$0xff] %vm103, %v737
    %802 = vst.msk [vmem:[%s3 + $0x1c8] sm:$0xff] %vm103, %v738
    %803 = vst.msk [vmem:[%s3 + $0x1d0] sm:$0xff] %vm103, %v739
    %804 = vst.msk [vmem:[%s3 + $0x1d8] sm:$0xff] %vm103, %v740
    %805 = vst.msk [vmem:[%s3 + $0x1e0] sm:$0xff] %vm103, %v741
    %806 = vst.msk [vmem:[%s3 + $0x1e8] sm:$0xff] %vm103, %v742
    %807 = vst.msk [vmem:[%s3 + $0x1f0] sm:$0xff] %vm103, %v743
    %808 = vst.msk [vmem:[%s3 + $0x1f8] sm:$0xff] %vm103, %v744
    // Predicated region
    $region18: #{spp_forward.3} parent=1 // pred_check
      _
    $region19: #{spp_forward.3} parent=1 // pred_check_branch
      %810 = sbr.rel (0) target = $region21
    $region20: #{spp_forward.3} parent=1 // pred_region
      _
    $region21: #{spp_forward.3} parent=1 // pred_fallthru
      _
    // Predicated region
    $region22: #{spp_forward.3} parent=1 // pred_check
      _
    $region23: #{spp_forward.3} parent=1 // pred_check_branch
      %812 = sbr.rel (0) target = $region25
    $region24: #{spp_forward.3} parent=1 // pred_region
      _
    $region25: #{spp_forward.3} parent=1 // pred_fallthru
      _
    %813 = vsyncpa [#allocation3], 1

// kernel: spp_forward.5
$region0: #{spp_forward.5}
  #allocation0 [shape = 'u32[]', space=smem, size = 0x4, offset = 0x4, fixed_abs, tag = 'smem constant byte address 0x4 - core index']
  #allocation1 [shape = 'u32[144,128]{1,0:T(1,128)}', space=vmem, size = 0x12000, scoped, tag = 'internal scratch']
  %s0 = inlined_call_operand.vmem [shape: f32[2,256,32], index: 0, kind: input, shape index: {}]
  %s1 = inlined_call_operand.vmem [shape: f32[32,8], index: 1, kind: input, shape index: {}]
  %s2 = inlined_call_operand.vmem [shape: f32[256,144], index: 2, kind: input, shape index: {}]
  %s3 = inlined_call_operand.vmem [shape: f32[2,144,8], index: 3, kind: input, shape index: {}]
  %s4 = inlined_call_operand.vmem [shape: f32[1,8], index: 4, kind: input, shape index: {}]
  %s5 = inlined_call_operand.vmem [shape: f32[2,256,8], index: 5, kind: output, shape index: {}]
  %s6 = sld [smem:[#allocation0]]
  $region53: #{spp_forward.5} parent=0
    _
  %s8 = ssub.s32 1, %s6
  %s9 = scalar_select 0, %s8, %s6
  loop: start=0, step=1, limit=4
  $region2: #{spp_forward.5} parent=0 // loop_pre_header
    _
  $region3: #{spp_forward.5} parent=0 // loop_header
    %s11 = sphi 0, %s15
    %p12 = scmp.ge.s32.totalorder %s11, 4
    %s18 = sphi 0, %s30
    %s19 = sphi 0, %s26
    %s20 = sphi 0, %s18
    %s21 = sphi 0, %s19
    %s22 = sphi 0, %s20
    %s23 = sphi 0, %s21
    %s35 = sphi 0, %s37
    %s38 = sphi 0, %s35
    %s39 = sphi 0, %s38
    %s55 = sphi 0, %s39
    %s59 = sphi 0, %s59
    %s61 = sphi 0, %s59
    %s62 = sphi 0, %s61
    %s76 = sphi 0, %s62
    %s82 = sphi 0, %s84
    %s85 = sphi 0, %s82
    %s86 = sphi 0, %s85
    %s102 = sphi 0, %s86
    %s108 = sphi 0, %s110
    %s111 = sphi 0, %s108
    %s112 = sphi 0, %s111
    %s128 = sphi 0, %s112
    %s132 = sphi 0, %s132
    %s134 = sphi 0, %s132
    %s135 = sphi 0, %s134
    %s149 = sphi 0, %s135
    %s157 = sphi 0, %s159
    %s160 = sphi 0, %s157
    %s161 = sphi 0, %s160
    %s177 = sphi 0, %s161
  $region4: #{spp_forward.5} parent=0 // loop_header_branch
    %14 = sbr.rel (%p12) target = $region8
  $region5: #{spp_forward.5} parent=0 // loop_body
    %s16 = ssub.s32 %s11, 1
    %s17 = ssub.s32 %s11, 2
    %s24 = sadd.s32 1, %s19
    %p25 = scmp.ge.s32.totalorder %s24, 1
    %s26 = scalar_select %p25, 0, %s24
    %s27 = sadd.s32 1, %s18
    %s28 = scalar_select %p25, %s27, %s18
    %p29 = scmp.ge.s32.totalorder %s28, 2
    %s30 = scalar_select %p29, 0, %s28
    %s31 = ssub.s32 %s18, %s30
    %s32 = ssub.s32 %s19, %s26
    %s33 = sor.u32 %s31, %s32
    %p34 = scmp.eq.s32.totalorder %s33, 0
    %s36 = sadd.s32 %s35, 1
    %s37 = scalar_select %p34, %s35, %s36
    %p40 = pneg %p34
    %p41 = scmp.eq.s32.totalorder %s11, 1
    %p42 = por %p40, %p41
    %p43 = scmp.ne.s32.totalorder %s35, %s38
    %p44 = scmp.eq.s32.totalorder %s11, 0
    %p45 = por %p43, %p44
    %p46 = scmp.ne.s32.totalorder %s35, %s38
    %p47 = scmp.eq.s32.totalorder %s16, 1
    %p48 = por %p46, %p47
    %p49 = scmp.ne.s32.totalorder %s38, %s39
    %p50 = scmp.eq.s32.totalorder %s16, 0
    %p51 = por %p49, %p50
    %p52 = scmp.ne.s32.totalorder %s38, %s39
    %p53 = scmp.eq.s32.totalorder %s17, 1
    %p54 = por %p52, %p53
    %p56 = scmp.ne.s32.totalorder %s39, %s55
    %p57 = scmp.eq.s32.totalorder %s17, 0
    %p58 = por %p56, %p57
    %s60 = sadd.s32 %s59, 1
    %p63 = scmp.eq.s32.totalorder %s11, 1
    %p64 = scmp.ne.s32.totalorder %s59, %s61
    %p65 = scmp.eq.s32.totalorder %s11, 0
    %p66 = por %p64, %p65
    %p67 = scmp.ne.s32.totalorder %s59, %s61
    %p68 = scmp.eq.s32.totalorder %s16, 1
    %p69 = por %p67, %p68
    %p70 = scmp.ne.s32.totalorder %s61, %s62
    %p71 = scmp.eq.s32.totalorder %s16, 0
    %p72 = por %p70, %p71
    %p73 = scmp.ne.s32.totalorder %s61, %s62
    %p74 = scmp.eq.s32.totalorder %s17, 1
    %p75 = por %p73, %p74
    %p77 = scmp.ne.s32.totalorder %s62, %s76
    %p78 = scmp.eq.s32.totalorder %s17, 0
    %p79 = por %p77, %p78
    %s80 = ssub.s32 %s19, %s26
    %p81 = scmp.eq.s32.totalorder %s80, 0
    %s83 = sadd.s32 %s82, 1
    %s84 = scalar_select %p81, %s82, %s83
    %p87 = pneg %p81
    %p88 = scmp.eq.s32.totalorder %s11, 1
    %p89 = por %p87, %p88
    %p90 = scmp.ne.s32.totalorder %s82, %s85
    %p91 = scmp.eq.s32.totalorder %s11, 0
    %p92 = por %p90, %p91
    %p93 = scmp.ne.s32.totalorder %s82, %s85
    %p94 = scmp.eq.s32.totalorder %s16, 1
    %p95 = por %p93, %p94
    %p96 = scmp.ne.s32.totalorder %s85, %s86
    %p97 = scmp.eq.s32.totalorder %s16, 0
    %p98 = por %p96, %p97
    %p99 = scmp.ne.s32.totalorder %s85, %s86
    %p100 = scmp.eq.s32.totalorder %s17, 1
    %p101 = por %p99, %p100
    %p103 = scmp.ne.s32.totalorder %s86, %s102
    %p104 = scmp.eq.s32.totalorder %s17, 0
    %p105 = por %p103, %p104
    %s106 = ssub.s32 %s18, %s30
    %p107 = scmp.eq.s32.totalorder %s106, 0
    %s109 = sadd.s32 %s108, 1
    %s110 = scalar_select %p107, %s108, %s109
    %p113 = pneg %p107
    %p114 = scmp.eq.s32.totalorder %s11, 1
    %p115 = por %p113, %p114
    %p116 = scmp.ne.s32.totalorder %s108, %s111
    %p117 = scmp.eq.s32.totalorder %s11, 0
    %p118 = por %p116, %p117
    %p119 = scmp.ne.s32.totalorder %s108, %s111
    %p120 = scmp.eq.s32.totalorder %s16, 1
    %p121 = por %p119, %p120
    %p122 = scmp.ne.s32.totalorder %s111, %s112
    %p123 = scmp.eq.s32.totalorder %s16, 0
    %p124 = por %p122, %p123
    %p125 = scmp.ne.s32.totalorder %s111, %s112
    %p126 = scmp.eq.s32.totalorder %s17, 1
    %p127 = por %p125, %p126
    %p129 = scmp.ne.s32.totalorder %s112, %s128
    %p130 = scmp.eq.s32.totalorder %s17, 0
    %p131 = por %p129, %p130
    %s133 = sadd.s32 %s132, 1
    %p136 = scmp.eq.s32.totalorder %s11, 1
    %p137 = scmp.ne.s32.totalorder %s132, %s134
    %p138 = scmp.eq.s32.totalorder %s11, 0
    %p139 = por %p137, %p138
    %p140 = scmp.ne.s32.totalorder %s132, %s134
    %p141 = scmp.eq.s32.totalorder %s16, 1
    %p142 = por %p140, %p141
    %p143 = scmp.ne.s32.totalorder %s134, %s135
    %p144 = scmp.eq.s32.totalorder %s16, 0
    %p145 = por %p143, %p144
    %p146 = scmp.ne.s32.totalorder %s134, %s135
    %p147 = scmp.eq.s32.totalorder %s17, 1
    %p148 = por %p146, %p147
    %p150 = scmp.ne.s32.totalorder %s135, %s149
    %p151 = scmp.eq.s32.totalorder %s17, 0
    %p152 = por %p150, %p151
    %s153 = ssub.s32 %s18, %s30
    %s154 = ssub.s32 %s19, %s26
    %s155 = sor.u32 %s153, %s154
    %p156 = scmp.eq.s32.totalorder %s155, 0
    %s158 = sadd.s32 %s157, 1
    %s159 = scalar_select %p156, %s157, %s158
    %p162 = pneg %p156
    %p163 = scmp.eq.s32.totalorder %s11, 1
    %p164 = por %p162, %p163
    %p165 = scmp.ne.s32.totalorder %s157, %s160
    %p166 = scmp.eq.s32.totalorder %s11, 0
    %p167 = por %p165, %p166
    %p168 = scmp.ne.s32.totalorder %s157, %s160
    %p169 = scmp.eq.s32.totalorder %s16, 1
    %p170 = por %p168, %p169
    %p171 = scmp.ne.s32.totalorder %s160, %s161
    %p172 = scmp.eq.s32.totalorder %s16, 0
    %p173 = por %p171, %p172
    %p174 = scmp.ne.s32.totalorder %s160, %s161
    %p175 = scmp.eq.s32.totalorder %s17, 1
    %p176 = por %p174, %p175
    %p178 = scmp.ne.s32.totalorder %s161, %s177
    %p179 = scmp.eq.s32.totalorder %s17, 0
    %p180 = por %p178, %p179
    %p181 = scmp.le.s32.totalorder 1, %s11
    %p182 = scmp.lt.s32.totalorder %s11, 3
    %p183 = pnand %p181, %p182
    %p184 = pneg %p183
    // Predicated region
    $region9: #{spp_forward.5} parent=5 // pred_check
      _
    $region10: #{spp_forward.5} parent=5 // pred_check_branch
      %186 = sbr.rel (%p183) target = $region12
    $region11: #{spp_forward.5} parent=5 // pred_region
      %s187 = ssub.s32 %s11, 1
      // Predicated region
      $region13: #{spp_forward.5} parent=11 // pred_check
        %p188 = pneg %p72
      $region14: #{spp_forward.5} parent=11 // pred_check_branch
        %190 = sbr.rel (%p188) target = $region16
      $region15: #{spp_forward.5} parent=11 // pred_region
        _
      $region16: #{spp_forward.5} parent=11 // pred_fallthru
        _
      // Predicated region
      $region17: #{spp_forward.5} parent=11 // pred_check
        %p191 = pneg %p98
      $region18: #{spp_forward.5} parent=11 // pred_check_branch
        %193 = sbr.rel (%p191) target = $region20
      $region19: #{spp_forward.5} parent=11 // pred_region
        %s194 = smul.u32 32, %s21
        %p195 = scmp.lt.s32.totalorder %s194, 31
        %s196 = scalar_select %p195, %s194, 31
        %s197 = smul.addr %s196, 2
        %s198 = smul.addr %s197, 8
        %s199 = scalar_lea.vmem %s2, %s198
        %s200 = smul.u32 32, %s21
      $region20: #{spp_forward.5} parent=11 // pred_fallthru
        _
      // Predicated region
      $region21: #{spp_forward.5} parent=11 // pred_check
        %p201 = pneg %p145
      $region22: #{spp_forward.5} parent=11 // pred_check_branch
        %203 = sbr.rel (%p201) target = $region24
      $region23: #{spp_forward.5} parent=11 // pred_region
        _
      $region24: #{spp_forward.5} parent=11 // pred_fallthru
        _
    $region12: #{spp_forward.5} parent=5 // pred_fallthru
      _
    %p204 = scmp.lt.s32.totalorder %s11, 2
    // Predicated region
    $region25: #{spp_forward.5} parent=5 // pred_check
      %p205 = pneg %p204
    $region26: #{spp_forward.5} parent=5 // pred_check_branch
      %207 = sbr.rel (%p205) target = $region28
    $region27: #{spp_forward.5} parent=5 // pred_region
      // Predicated region
      $region29: #{spp_forward.5} parent=27 // pred_check
        %p208 = pneg %p45
      $region30: #{spp_forward.5} parent=27 // pred_check_branch
        %210 = sbr.rel (%p208) target = $region32
      $region31: #{spp_forward.5} parent=27 // pred_region
        %s211 = smul.u32 32, %s19
        %p212 = scmp.lt.s32.totalorder %s18, 1
        %s213 = scalar_select %p212, %s18, 1
        %p214 = scmp.lt.s32.totalorder %s211, 31
        %s215 = scalar_select %p214, %s211, 31
        %s216 = smul.addr %s213, 32
        %s217 = sadd.s32 %s215, %s216
        %s218 = smul.addr %s217, 8
        %s219 = scalar_lea.vmem %s0, %s218
        %s220 = smul.u32 32, %s19
      $region32: #{spp_forward.5} parent=27 // pred_fallthru
        _
      // Predicated region
      $region33: #{spp_forward.5} parent=27 // pred_check
        %p221 = pneg %p118
      $region34: #{spp_forward.5} parent=27 // pred_check_branch
        %223 = sbr.rel (%p221) target = $region36
      $region35: #{spp_forward.5} parent=27 // pred_region
        %p224 = scmp.lt.s32.totalorder %s18, 1
        %s225 = scalar_select %p224, %s18, 1
        %s226 = smul.addr %s225, 18
        %s227 = smul.addr %s226, 8
        %s228 = scalar_lea.vmem %s3, %s227
      $region36: #{spp_forward.5} parent=27 // pred_fallthru
        _
    $region28: #{spp_forward.5} parent=5 // pred_fallthru
      _
    %p229 = scmp.le.s32.totalorder 1, %s11
    %p230 = scmp.lt.s32.totalorder %s11, 3
    %p231 = pnand %p229, %p230
    %p232 = pneg %p231
    // Predicated region
    $region37: #{spp_forward.5} parent=5 // pred_check
      _
    $region38: #{spp_forward.5} parent=5 // pred_check_branch
      %234 = sbr.rel (%p231) target = $region40
    $region39: #{spp_forward.5} parent=5 // pred_region
      %s235 = ssub.s32 %s11, 1
      %s236 = smul.u32 32, %s21
      %p237 = scmp.lt.s32.totalorder %s20, 1
      %s238 = scalar_select %p237, %s20, 1
      %p239 = scmp.lt.s32.totalorder %s236, 31
      %s240 = scalar_select %p239, %s236, 31
      %s241 = smul.addr %s238, 32
      %s242 = sadd.s32 %s240, %s241
      %s243 = smul.addr %s242, 8
      %s244 = scalar_lea.vmem %s0, %s243
      %p245 = pneg %p51
      %p246 = pneg %p48
      %p247 = pneg %p72
      %p248 = pneg %p69
      %s249 = smul.u32 32, %s21
      %p250 = scmp.lt.s32.totalorder %s249, 31
      %s251 = scalar_select %p250, %s249, 31
      %s252 = smul.addr %s251, 2
      %s253 = smul.addr %s252, 8
      %s254 = scalar_lea.vmem %s2, %s253
      %p255 = pneg %p98
      %p256 = pneg %p95
      %p257 = scmp.lt.s32.totalorder %s20, 1
      %s258 = scalar_select %p257, %s20, 1
      %s259 = smul.addr %s258, 18
      %s260 = smul.addr %s259, 8
      %s261 = scalar_lea.vmem %s3, %s260
      %p262 = pneg %p124
      %p263 = pneg %p121
      %p264 = pneg %p145
      %p265 = pneg %p142
      %p266 = pneg %p173
      %p267 = pneg %p170
      %s268 = smul.u32 32, %s21
      %p269 = scmp.lt.s32.totalorder %s20, 1
      %s270 = scalar_select %p269, %s20, 1
      %p271 = scmp.lt.s32.totalorder %s268, 31
      %s272 = scalar_select %p271, %s268, 31
      %s273 = smul.addr %s270, 32
      %s274 = sadd.s32 %s272, %s273
      %s275 = smul.addr %s274, 8
      %s276 = scalar_lea.vmem %s5, %s275
      %s277 = smul.u32 32, %s21
      %p278 = scmp.lt.s32.totalorder %s20, 1
      %s279 = scalar_select %p278, %s20, 1
      %p280 = scmp.lt.s32.totalorder %s277, 31
      %s281 = scalar_select %p280, %s277, 31
      %s282 = smul.addr %s279, 32
      %s283 = sadd.s32 %s281, %s282
      %s284 = smul.addr %s283, 8
      %s285 = scalar_lea.vmem %s0, %s284
      %s286 = smul.u32 32, %s21
      %s287 = smul.u32 32, %s21
      %p288 = scmp.lt.s32.totalorder %s287, 31
      %s289 = scalar_select %p288, %s287, 31
      %s290 = smul.addr %s289, 2
      %s291 = smul.addr %s290, 8
      %s292 = scalar_lea.vmem %s2, %s291
      %s293 = smul.u32 32, %s21
      %p294 = scmp.lt.s32.totalorder %s20, 1
      %s295 = scalar_select %p294, %s20, 1
      %s296 = smul.addr %s295, 18
      %s297 = smul.addr %s296, 8
      %s298 = scalar_lea.vmem %s3, %s297
      %s299 = smul.u32 32, %s21
      %p300 = scmp.lt.s32.totalorder %s20, 1
      %s301 = scalar_select %p300, %s20, 1
      %p302 = scmp.lt.s32.totalorder %s299, 31
      %s303 = scalar_select %p302, %s299, 31
      %s304 = smul.addr %s301, 32
      %s305 = sadd.s32 %s303, %s304
      %s306 = smul.addr %s305, 8
      %s307 = scalar_lea.vmem %s5, %s306
      %s308 = smul.u32 32, %s21
      %v309 = vld [vmem:[%s285] sm:$0xff]
      %v310 = vld [vmem:[%s285 + $0x8] sm:$0xff]
      %v311 = vld [vmem:[%s285 + $0x10] sm:$0xff]
      %v312 = vld [vmem:[%s285 + $0x18] sm:$0xff]
      %v313 = vld [vmem:[%s285 + $0x20] sm:$0xff]
      %v314 = vld [vmem:[%s285 + $0x28] sm:$0xff]
      %v315 = vld [vmem:[%s285 + $0x30] sm:$0xff]
      %v316 = vld [vmem:[%s285 + $0x38] sm:$0xff]
      %v317 = vld [vmem:[%s285 + $0x40] sm:$0xff]
      %v318 = vld [vmem:[%s285 + $0x48] sm:$0xff]
      %v319 = vld [vmem:[%s285 + $0x50] sm:$0xff]
      %v320 = vld [vmem:[%s285 + $0x58] sm:$0xff]
      %v321 = vld [vmem:[%s285 + $0x60] sm:$0xff]
      %v322 = vld [vmem:[%s285 + $0x68] sm:$0xff]
      %v323 = vld [vmem:[%s285 + $0x70] sm:$0xff]
      %v324 = vld [vmem:[%s285 + $0x78] sm:$0xff]
      %v325 = vld [vmem:[%s285 + $0x80] sm:$0xff]
      %v326 = vld [vmem:[%s285 + $0x88] sm:$0xff]
      %v327 = vld [vmem:[%s285 + $0x90] sm:$0xff]
      %v328 = vld [vmem:[%s285 + $0x98] sm:$0xff]
      %v329 = vld [vmem:[%s285 + $0xa0] sm:$0xff]
      %v330 = vld [vmem:[%s285 + $0xa8] sm:$0xff]
      %v331 = vld [vmem:[%s285 + $0xb0] sm:$0xff]
      %v332 = vld [vmem:[%s285 + $0xb8] sm:$0xff]
      %v333 = vld [vmem:[%s285 + $0xc0] sm:$0xff]
      %v334 = vld [vmem:[%s285 + $0xc8] sm:$0xff]
      %v335 = vld [vmem:[%s285 + $0xd0] sm:$0xff]
      %v336 = vld [vmem:[%s285 + $0xd8] sm:$0xff]
      %v337 = vld [vmem:[%s285 + $0xe0] sm:$0xff]
      %v338 = vld [vmem:[%s285 + $0xe8] sm:$0xff]
      %v339 = vld [vmem:[%s285 + $0xf0] sm:$0xff]
      %v340 = vld [vmem:[%s285 + $0xf8] sm:$0xff]
      %v341 = vld [vmem:[%s1] sm:$0xff]
      %v342 = vld [vmem:[%s1 + $0x8] sm:$0xff]
      %v343 = vld [vmem:[%s1 + $0x10] sm:$0xff]
      %v344 = vld [vmem:[%s1 + $0x18] sm:$0xff]
      %v345 = vld [vmem:[%s292] sm:$0xff]
      %v346 = vld [vmem:[%s292 + $0x8] sm:$0xff]
      %v347 = vld [vmem:[%s292 + $0x10] sm:$0xff]
      %v348 = vld [vmem:[%s292 + $0x18] sm:$0xff]
      %v349 = vld [vmem:[%s292 + $0x20] sm:$0xff]
      %v350 = vld [vmem:[%s292 + $0x28] sm:$0xff]
      %v351 = vld [vmem:[%s292 + $0x30] sm:$0xff]
      %v352 = vld [vmem:[%s292 + $0x38] sm:$0xff]
      %v353 = vld [vmem:[%s292 + $0x40] sm:$0xff]
      %v354 = vld [vmem:[%s292 + $0x48] sm:$0xff]
      %v355 = vld [vmem:[%s292 + $0x50] sm:$0xff]
      %v356 = vld [vmem:[%s292 + $0x58] sm:$0xff]
      %v357 = vld [vmem:[%s292 + $0x60] sm:$0xff]
      %v358 = vld [vmem:[%s292 + $0x68] sm:$0xff]
      %v359 = vld [vmem:[%s292 + $0x70] sm:$0xff]
      %v360 = vld [vmem:[%s292 + $0x78] sm:$0xff]
      %v361 = vld [vmem:[%s292 + $0x80] sm:$0xff]
      %v362 = vld [vmem:[%s292 + $0x88] sm:$0xff]
      %v363 = vld [vmem:[%s292 + $0x90] sm:$0xff]
      %v364 = vld [vmem:[%s292 + $0x98] sm:$0xff]
      %v365 = vld [vmem:[%s292 + $0xa0] sm:$0xff]
      %v366 = vld [vmem:[%s292 + $0xa8] sm:$0xff]
      %v367 = vld [vmem:[%s292 + $0xb0] sm:$0xff]
      %v368 = vld [vmem:[%s292 + $0xb8] sm:$0xff]
      %v369 = vld [vmem:[%s292 + $0xc0] sm:$0xff]
      %v370 = vld [vmem:[%s292 + $0xc8] sm:$0xff]
      %v371 = vld [vmem:[%s292 + $0xd0] sm:$0xff]
      %v372 = vld [vmem:[%s292 + $0xd8] sm:$0xff]
      %v373 = vld [vmem:[%s292 + $0xe0] sm:$0xff]
      %v374 = vld [vmem:[%s292 + $0xe8] sm:$0xff]
      %v375 = vld [vmem:[%s292 + $0xf0] sm:$0xff]
      %v376 = vld [vmem:[%s292 + $0xf8] sm:$0xff]
      %v377 = vld [vmem:[%s292 + $0x100] sm:$0xff]
      %v378 = vld [vmem:[%s292 + $0x108] sm:$0xff]
      %v379 = vld [vmem:[%s292 + $0x110] sm:$0xff]
      %v380 = vld [vmem:[%s292 + $0x118] sm:$0xff]
      %v381 = vld [vmem:[%s292 + $0x120] sm:$0xff]
      %v382 = vld [vmem:[%s292 + $0x128] sm:$0xff]
      %v383 = vld [vmem:[%s292 + $0x130] sm:$0xff]
      %v384 = vld [vmem:[%s292 + $0x138] sm:$0xff]
      %v385 = vld [vmem:[%s292 + $0x140] sm:$0xff]
      %v386 = vld [vmem:[%s292 + $0x148] sm:$0xff]
      %v387 = vld [vmem:[%s292 + $0x150] sm:$0xff]
      %v388 = vld [vmem:[%s292 + $0x158] sm:$0xff]
      %v389 = vld [vmem:[%s292 + $0x160] sm:$0xff]
      %v390 = vld [vmem:[%s292 + $0x168] sm:$0xff]
      %v391 = vld [vmem:[%s292 + $0x170] sm:$0xff]
      %v392 = vld [vmem:[%s292 + $0x178] sm:$0xff]
      %v393 = vld [vmem:[%s292 + $0x180] sm:$0xff]
      %v394 = vld [vmem:[%s292 + $0x188] sm:$0xff]
      %v395 = vld [vmem:[%s292 + $0x190] sm:$0xff]
      %v396 = vld [vmem:[%s292 + $0x198] sm:$0xff]
      %v397 = vld [vmem:[%s292 + $0x1a0] sm:$0xff]
      %v398 = vld [vmem:[%s292 + $0x1a8] sm:$0xff]
      %v399 = vld [vmem:[%s292 + $0x1b0] sm:$0xff]
      %v400 = vld [vmem:[%s292 + $0x1b8] sm:$0xff]
      %v401 = vld [vmem:[%s292 + $0x1c0] sm:$0xff]
      %v402 = vld [vmem:[%s292 + $0x1c8] sm:$0xff]
      %v403 = vld [vmem:[%s292 + $0x1d0] sm:$0xff]
      %v404 = vld [vmem:[%s292 + $0x1d8] sm:$0xff]
      %v405 = vld [vmem:[%s292 + $0x1e0] sm:$0xff]
      %v406 = vld [vmem:[%s292 + $0x1e8] sm:$0xff]
      %v407 = vld [vmem:[%s292 + $0x1f0] sm:$0xff]
      %v408 = vld [vmem:[%s292 + $0x1f8] sm:$0xff]
      %v409 = vld [vmem:[%s298] sm:$0xff]
      %v410 = vld [vmem:[%s298 + $0x8] sm:$0xff]
      %v411 = vld [vmem:[%s298 + $0x10] sm:$0xff]
      %v412 = vld [vmem:[%s298 + $0x18] sm:$0xff]
      %v413 = vld [vmem:[%s298 + $0x20] sm:$0xff]
      %v414 = vld [vmem:[%s298 + $0x28] sm:$0xff]
      %v415 = vld [vmem:[%s298 + $0x30] sm:$0xff]
      %v416 = vld [vmem:[%s298 + $0x38] sm:$0xff]
      %v417 = vld [vmem:[%s298 + $0x40] sm:$0xff]
      %v418 = vld [vmem:[%s298 + $0x48] sm:$0xff]
      %v419 = vld [vmem:[%s298 + $0x50] sm:$0xff]
      %v420 = vld [vmem:[%s298 + $0x58] sm:$0xff]
      %v421 = vld [vmem:[%s298 + $0x60] sm:$0xff]
      %v422 = vld [vmem:[%s298 + $0x68] sm:$0xff]
      %v423 = vld [vmem:[%s298 + $0x70] sm:$0xff]
      %v424 = vld [vmem:[%s298 + $0x78] sm:$0xff]
      %v425 = vld [vmem:[%s298 + $0x80] sm:$0xff]
      %v426 = vld [vmem:[%s298 + $0x88] sm:$0xff]
      %vm427 = vcmask 130048
      %v429 = vsel %vm427, %v346, 0
      %v432 = vsel %vm427, %v348, 0
      %v435 = vsel %vm427, %v350, 0
      %v438 = vsel %vm427, %v352, 0
      %v441 = vsel %vm427, %v354, 0
      %v444 = vsel %vm427, %v356, 0
      %v447 = vsel %vm427, %v358, 0
      %v450 = vsel %vm427, %v360, 0
      %v453 = vsel %vm427, %v362, 0
      %v456 = vsel %vm427, %v364, 0
      %v459 = vsel %vm427, %v366, 0
      %v462 = vsel %vm427, %v368, 0
      %v465 = vsel %vm427, %v370, 0
      %v468 = vsel %vm427, %v372, 0
      %v471 = vsel %vm427, %v374, 0
      %v474 = vsel %vm427, %v376, 0
      %v477 = vsel %vm427, %v378, 0
      %v480 = vsel %vm427, %v380, 0
      %v483 = vsel %vm427, %v382, 0
      %v486 = vsel %vm427, %v384, 0
      %v489 = vsel %vm427, %v386, 0
      %v492 = vsel %vm427, %v388, 0
      %v495 = vsel %vm427, %v390, 0
      %v498 = vsel %vm427, %v392, 0
      %v501 = vsel %vm427, %v394, 0
      %v504 = vsel %vm427, %v396, 0
      %v507 = vsel %vm427, %v398, 0
      %v510 = vsel %vm427, %v400, 0
      %v513 = vsel %vm427, %v402, 0
      %v516 = vsel %vm427, %v404, 0
      %v519 = vsel %vm427, %v406, 0
      %v522 = vsel %vm427, %v408, 0
      %524 = vmatprep.subr.mxu0 0.0
      %525 = vmatpush1.msra.mxu0 %v424
      %526 = vmatprep.subr.mxu0 0.0
      %527 = vmatpush1.msra.mxu0 %v423
      %528 = vmatprep.subr.mxu0 0.0
      %529 = vmatpush1.msra.mxu0 %v422
      %530 = vmatprep.subr.mxu0 0.0
      %531 = vmatpush1.msra.mxu0 %v421
      %532 = vmatprep.subr.mxu0 0.0
      %533 = vmatpush1.msra.mxu0 %v420
      %534 = vmatprep.subr.mxu0 0.0
      %535 = vmatpush1.msra.mxu0 %v419
      %536 = vmatprep.subr.mxu0 0.0
      %537 = vmatpush1.msra.mxu0 %v418
      %538 = vmatprep.subr.mxu0 0.0
      %539 = vmatpush1.msra.mxu0 %v417
      %540 = vmatprep.subr.mxu0 0.0
      %541 = vmatpush1.msra.mxu0 %v416
      %542 = vmatprep.subr.mxu0 0.0
      %543 = vmatpush1.msra.mxu0 %v415
      %544 = vmatprep.subr.mxu0 0.0
      %545 = vmatpush1.msra.mxu0 %v414
      %546 = vmatprep.subr.mxu0 0.0
      %547 = vmatpush1.msra.mxu0 %v413
      %548 = vmatprep.subr.mxu0 0.0
      %549 = vmatpush1.msra.mxu0 %v412
      %550 = vmatprep.subr.mxu0 0.0
      %551 = vmatpush1.msra.mxu0 %v411
      %552 = vmatprep.subr.mxu0 0.0
      %553 = vmatpush1.msra.mxu0 %v410
      %554 = vmatprep.subr.mxu0 0.0
      %555 = vmatpush1.msra.mxu0 %v409
      %556 = vmatprep.subr.mxu0 0.0
      %557 = vmatpush2.msra.mxu0 0.0
      %558 = vmatprep.subr.mxu0 0.0
      %559 = vmatpush2.msra.mxu0 0.0
      %560 = vmatprep.subr.mxu0 0.0
      %561 = vmatpush2.msra.mxu0 0.0
      %562 = vmatprep.subr.mxu0 0.0
      %563 = vmatpush2.msra.mxu0 0.0
      %564 = vmatprep.subr.mxu0 0.0
      %565 = vmatpush2.msra.mxu0 0.0
      %566 = vmatprep.subr.mxu0 0.0
      %567 = vmatpush2.msra.mxu0 0.0
      %568 = vmatprep.subr.mxu0 0.0
      %569 = vmatpush2.msra.mxu0 0.0
      %570 = vmatprep.subr.mxu0 0.0
      %571 = vmatpush2.msra.mxu0 0.0
      %572 = vmatprep.subr.mxu0 0.0
      %573 = vmatpush2.msra.mxu0 0.0
      %574 = vmatprep.subr.mxu0 0.0
      %575 = vmatpush2.msra.mxu0 0.0
      %576 = vmatprep.subr.mxu0 0.0
      %577 = vmatpush2.msra.mxu0 0.0
      %578 = vmatprep.subr.mxu0 0.0
      %579 = vmatpush2.msra.mxu0 0.0
      %580 = vmatprep.subr.mxu0 0.0
      %581 = vmatpush2.msra.mxu0 0.0
      %582 = vmatprep.subr.mxu0 0.0
      %583 = vmatpush2.msra.mxu0 0.0
      %584 = vmatprep.subr.mxu0 0.0
      %585 = vmatpush2.msra.mxu0 %v426
      %586 = vmatprep.subr.mxu0 0.0
      %587 = vmatpush2.msra.mxu0 %v425
      %588 = vmatprep.mubr.f32.mxu0 %v429
      %589 = vmatmul.mubr.f32.gmra.mxu0 %v345
      %v590 = vpop.f32.mrf.mxu0
      %v591 = vadd.f32 0.0, %v590
      %v592 = vpop.f32.mrf.mxu0
      %593 = vmatprep.mubr.f32.mxu0 %v432
      %594 = vmatmul.mubr.f32.gmra.mxu0 %v347
      %v595 = vpop.f32.mrf.mxu0
      %v596 = vadd.f32 0.0, %v595
      %v597 = vpop.f32.mrf.mxu0
      %598 = vmatprep.mubr.f32.mxu0 %v435
      %599 = vmatmul.mubr.f32.gmra.mxu0 %v349
      %v600 = vpop.f32.mrf.mxu0
      %v601 = vadd.f32 0.0, %v600
      %v602 = vpop.f32.mrf.mxu0
      %603 = vmatprep.mubr.f32.mxu0 %v438
      %604 = vmatmul.mubr.f32.gmra.mxu0 %v351
      %v605 = vpop.f32.mrf.mxu0
      %v606 = vadd.f32 0.0, %v605
      %v607 = vpop.f32.mrf.mxu0
      %608 = vmatprep.mubr.f32.mxu0 %v441
      %609 = vmatmul.mubr.f32.gmra.mxu0 %v353
      %v610 = vpop.f32.mrf.mxu0
      %v611 = vadd.f32 0.0, %v610
      %v612 = vpop.f32.mrf.mxu0
      %613 = vmatprep.mubr.f32.mxu0 %v444
      %614 = vmatmul.mubr.f32.gmra.mxu0 %v355
      %v615 = vpop.f32.mrf.mxu0
      %v616 = vadd.f32 0.0, %v615
      %v617 = vpop.f32.mrf.mxu0
      %618 = vmatprep.mubr.f32.mxu0 %v447
      %619 = vmatmul.mubr.f32.gmra.mxu0 %v357
      %v620 = vpop.f32.mrf.mxu0
      %v621 = vadd.f32 0.0, %v620
      %v622 = vpop.f32.mrf.mxu0
      %623 = vmatprep.mubr.f32.mxu0 %v450
      %624 = vmatmul.mubr.f32.gmra.mxu0 %v359
      %v625 = vpop.f32.mrf.mxu0
      %v626 = vadd.f32 0.0, %v625
      %v627 = vpop.f32.mrf.mxu0
      %628 = vmatprep.mubr.f32.mxu0 %v453
      %629 = vmatmul.mubr.f32.gmra.mxu0 %v361
      %v630 = vpop.f32.mrf.mxu0
      %v631 = vadd.f32 0.0, %v630
      %v632 = vpop.f32.mrf.mxu0
      %633 = vmatprep.mubr.f32.mxu0 %v456
      %634 = vmatmul.mubr.f32.gmra.mxu0 %v363
      %v635 = vpop.f32.mrf.mxu0
      %v636 = vadd.f32 0.0, %v635
      %v637 = vpop.f32.mrf.mxu0
      %638 = vmatprep.mubr.f32.mxu0 %v459
      %639 = vmatmul.mubr.f32.gmra.mxu0 %v365
      %v640 = vpop.f32.mrf.mxu0
      %v641 = vadd.f32 0.0, %v640
      %v642 = vpop.f32.mrf.mxu0
      %643 = vmatprep.mubr.f32.mxu0 %v462
      %644 = vmatmul.mubr.f32.gmra.mxu0 %v367
      %v645 = vpop.f32.mrf.mxu0
      %v646 = vadd.f32 0.0, %v645
      %v647 = vpop.f32.mrf.mxu0
      %648 = vmatprep.mubr.f32.mxu0 %v465
      %649 = vmatmul.mubr.f32.gmra.mxu0 %v369
      %v650 = vpop.f32.mrf.mxu0
      %v651 = vadd.f32 0.0, %v650
      %v652 = vpop.f32.mrf.mxu0
      %653 = vmatprep.mubr.f32.mxu0 %v468
      %654 = vmatmul.mubr.f32.gmra.mxu0 %v371
      %v655 = vpop.f32.mrf.mxu0
      %v656 = vadd.f32 0.0, %v655
      %v657 = vpop.f32.mrf.mxu0
      %658 = vmatprep.mubr.f32.mxu0 %v471
      %659 = vmatmul.mubr.f32.gmra.mxu0 %v373
      %v660 = vpop.f32.mrf.mxu0
      %v661 = vadd.f32 0.0, %v660
      %v662 = vpop.f32.mrf.mxu0
      %663 = vmatprep.mubr.f32.mxu0 %v474
      %664 = vmatmul.mubr.f32.gmra.mxu0 %v375
      %v665 = vpop.f32.mrf.mxu0
      %v666 = vadd.f32 0.0, %v665
      %v667 = vpop.f32.mrf.mxu0
      %668 = vmatprep.mubr.f32.mxu0 %v477
      %669 = vmatmul.mubr.f32.gmra.mxu0 %v377
      %v670 = vpop.f32.mrf.mxu0
      %v671 = vadd.f32 0.0, %v670
      %v672 = vpop.f32.mrf.mxu0
      %673 = vmatprep.mubr.f32.mxu0 %v480
      %674 = vmatmul.mubr.f32.gmra.mxu0 %v379
      %v675 = vpop.f32.mrf.mxu0
      %v676 = vadd.f32 0.0, %v675
      %v677 = vpop.f32.mrf.mxu0
      %678 = vmatprep.mubr.f32.mxu0 %v483
      %679 = vmatmul.mubr.f32.gmra.mxu0 %v381
      %v680 = vpop.f32.mrf.mxu0
      %v681 = vadd.f32 0.0, %v680
      %v682 = vpop.f32.mrf.mxu0
      %683 = vmatprep.mubr.f32.mxu0 %v486
      %684 = vmatmul.mubr.f32.gmra.mxu0 %v383
      %v685 = vpop.f32.mrf.mxu0
      %v686 = vadd.f32 0.0, %v685
      %v687 = vpop.f32.mrf.mxu0
      %688 = vmatprep.mubr.f32.mxu0 %v489
      %689 = vmatmul.mubr.f32.gmra.mxu0 %v385
      %v690 = vpop.f32.mrf.mxu0
      %v691 = vadd.f32 0.0, %v690
      %v692 = vpop.f32.mrf.mxu0
      %693 = vmatprep.mubr.f32.mxu0 %v492
      %694 = vmatmul.mubr.f32.gmra.mxu0 %v387
      %v695 = vpop.f32.mrf.mxu0
      %v696 = vadd.f32 0.0, %v695
      %v697 = vpop.f32.mrf.mxu0
      %698 = vmatprep.mubr.f32.mxu0 %v495
      %699 = vmatmul.mubr.f32.gmra.mxu0 %v389
      %v700 = vpop.f32.mrf.mxu0
      %v701 = vadd.f32 0.0, %v700
      %v702 = vpop.f32.mrf.mxu0
      %703 = vmatprep.mubr.f32.mxu0 %v498
      %704 = vmatmul.mubr.f32.gmra.mxu0 %v391
      %v705 = vpop.f32.mrf.mxu0
      %v706 = vadd.f32 0.0, %v705
      %v707 = vpop.f32.mrf.mxu0
      %708 = vmatprep.mubr.f32.mxu0 %v501
      %709 = vmatmul.mubr.f32.gmra.mxu0 %v393
      %v710 = vpop.f32.mrf.mxu0
      %v711 = vadd.f32 0.0, %v710
      %v712 = vpop.f32.mrf.mxu0
      %713 = vmatprep.mubr.f32.mxu0 %v504
      %714 = vmatmul.mubr.f32.gmra.mxu0 %v395
      %v715 = vpop.f32.mrf.mxu0
      %v716 = vadd.f32 0.0, %v715
      %v717 = vpop.f32.mrf.mxu0
      %718 = vmatprep.mubr.f32.mxu0 %v507
      %719 = vmatmul.mubr.f32.gmra.mxu0 %v397
      %v720 = vpop.f32.mrf.mxu0
      %v721 = vadd.f32 0.0, %v720
      %v722 = vpop.f32.mrf.mxu0
      %723 = vmatprep.mubr.f32.mxu0 %v510
      %724 = vmatmul.mubr.f32.gmra.mxu0 %v399
      %v725 = vpop.f32.mrf.mxu0
      %v726 = vadd.f32 0.0, %v725
      %v727 = vpop.f32.mrf.mxu0
      %728 = vmatprep.mubr.f32.mxu0 %v513
      %729 = vmatmul.mubr.f32.gmra.mxu0 %v401
      %v730 = vpop.f32.mrf.mxu0
      %v731 = vadd.f32 0.0, %v730
      %v732 = vpop.f32.mrf.mxu0
      %733 = vmatprep.mubr.f32.mxu0 %v516
      %734 = vmatmul.mubr.f32.gmra.mxu0 %v403
      %v735 = vpop.f32.mrf.mxu0
      %v736 = vadd.f32 0.0, %v735
      %v737 = vpop.f32.mrf.mxu0
      %738 = vmatprep.mubr.f32.mxu0 %v519
      %739 = vmatmul.mubr.f32.gmra.mxu0 %v405
      %v740 = vpop.f32.mrf.mxu0
      %v741 = vadd.f32 0.0, %v740
      %v742 = vpop.f32.mrf.mxu0
      %743 = vmatprep.mubr.f32.mxu0 %v522
      %744 = vmatmul.mubr.f32.gmra.mxu0 %v407
      %v745 = vpop.f32.mrf.mxu0
      %v746 = vadd.f32 0.0, %v745
      %v747 = vpop.f32.mrf.mxu0
      %748 = vdwg.mxu0
      %vm749 = vcmask 261120
      %v751 = vsel %vm749, %v309, 0
      %v754 = vsel %vm749, %v310, 0
      %v757 = vsel %vm749, %v311, 0
      %v760 = vsel %vm749, %v312, 0
      %v763 = vsel %vm749, %v313, 0
      %v766 = vsel %vm749, %v314, 0
      %v769 = vsel %vm749, %v315, 0
      %v772 = vsel %vm749, %v316, 0
      %v775 = vsel %vm749, %v317, 0
      %v778 = vsel %vm749, %v318, 0
      %v781 = vsel %vm749, %v319, 0
      %v784 = vsel %vm749, %v320, 0
      %v787 = vsel %vm749, %v321, 0
      %v790 = vsel %vm749, %v322, 0
      %v793 = vsel %vm749, %v323, 0
      %v796 = vsel %vm749, %v324, 0
      %v799 = vsel %vm749, %v325, 0
      %v802 = vsel %vm749, %v326, 0
      %v805 = vsel %vm749, %v327, 0
      %v808 = vsel %vm749, %v328, 0
      %v811 = vsel %vm749, %v329, 0
      %v814 = vsel %vm749, %v330, 0
      %v817 = vsel %vm749, %v331, 0
      %v820 = vsel %vm749, %v332, 0
      %v823 = vsel %vm749, %v333, 0
      %v826 = vsel %vm749, %v334, 0
      %v829 = vsel %vm749, %v335, 0
      %v832 = vsel %vm749, %v336, 0
      %v835 = vsel %vm749, %v337, 0
      %v838 = vsel %vm749, %v338, 0
      %v841 = vsel %vm749, %v339, 0
      %v844 = vsel %vm749, %v340, 0
      %846 = vmatprep.subr.mxu0 0.0
      %847 = vmatpush1.msra.mxu0 0.0
      %848 = vmatprep.subr.mxu0 0.0
      %849 = vmatpush1.msra.mxu0 0.0
      %850 = vmatprep.subr.mxu0 0.0
      %851 = vmatpush1.msra.mxu0 0.0
      %852 = vmatprep.subr.mxu0 0.0
      %853 = vmatpush1.msra.mxu0 0.0
      %854 = vmatprep.subr.mxu0 0.0
      %855 = vmatpush1.msra.mxu0 0.0
      %856 = vmatprep.subr.mxu0 0.0
      %857 = vmatpush1.msra.mxu0 0.0
      %858 = vmatprep.subr.mxu0 0.0
      %859 = vmatpush1.msra.mxu0 0.0
      %860 = vmatprep.subr.mxu0 0.0
      %861 = vmatpush1.msra.mxu0 0.0
      %862 = vmatprep.subr.mxu0 0.0
      %863 = vmatpush1.msra.mxu0 0.0
      %864 = vmatprep.subr.mxu0 0.0
      %865 = vmatpush1.msra.mxu0 0.0
      %866 = vmatprep.subr.mxu0 0.0
      %867 = vmatpush1.msra.mxu0 0.0
      %868 = vmatprep.subr.mxu0 0.0
      %869 = vmatpush1.msra.mxu0 0.0
      %870 = vmatprep.subr.mxu0 0.0
      %871 = vmatpush1.msra.mxu0 %v344
      %872 = vmatprep.subr.mxu0 0.0
      %873 = vmatpush1.msra.mxu0 %v343
      %874 = vmatprep.subr.mxu0 0.0
      %875 = vmatpush1.msra.mxu0 %v342
      %876 = vmatprep.subr.mxu0 0.0
      %877 = vmatpush1.msra.mxu0 %v341
      %878 = vmatprep.subr.mxu0 0.0
      %879 = vmatpush2.msra.mxu0 0.0
      %880 = vmatprep.subr.mxu0 0.0
      %881 = vmatpush2.msra.mxu0 0.0
      %882 = vmatprep.subr.mxu0 0.0
      %883 = vmatpush2.msra.mxu0 0.0
      %884 = vmatprep.subr.mxu0 0.0
      %885 = vmatpush2.msra.mxu0 0.0
      %886 = vmatprep.subr.mxu0 0.0
      %887 = vmatpush2.msra.mxu0 0.0
      %888 = vmatprep.subr.mxu0 0.0
      %889 = vmatpush2.msra.mxu0 0.0
      %890 = vmatprep.subr.mxu0 0.0
      %891 = vmatpush2.msra.mxu0 0.0
      %892 = vmatprep.subr.mxu0 0.0
      %893 = vmatpush2.msra.mxu0 0.0
      %894 = vmatprep.subr.mxu0 0.0
      %895 = vmatpush2.msra.mxu0 0.0
      %896 = vmatprep.subr.mxu0 0.0
      %897 = vmatpush2.msra.mxu0 0.0
      %898 = vmatprep.subr.mxu0 0.0
      %899 = vmatpush2.msra.mxu0 0.0
      %900 = vmatprep.subr.mxu0 0.0
      %901 = vmatpush2.msra.mxu0 0.0
      %902 = vmatprep.subr.mxu0 0.0
      %903 = vmatpush2.msra.mxu0 0.0
      %904 = vmatprep.subr.mxu0 0.0
      %905 = vmatpush2.msra.mxu0 0.0
      %906 = vmatprep.subr.mxu0 0.0
      %907 = vmatpush2.msra.mxu0 0.0
      %908 = vmatprep.subr.mxu0 0.0
      %909 = vmatpush2.msra.mxu0 0.0
      %910 = vmatprep.mubr.f32.mxu0 0.0
      %911 = vmatmul.mubr.f32.gmra.mxu0 %v751
      %v912 = vpop.f32.mrf.mxu0
      %v913 = vadd.f32 %v591, %v912
      %v914 = vpop.f32.mrf.mxu0
      %915 = vmatprep.mubr.f32.mxu0 0.0
      %916 = vmatmul.mubr.f32.gmra.mxu0 %v754
      %v917 = vpop.f32.mrf.mxu0
      %v918 = vadd.f32 %v596, %v917
      %v919 = vpop.f32.mrf.mxu0
      %920 = vmatprep.mubr.f32.mxu0 0.0
      %921 = vmatmul.mubr.f32.gmra.mxu0 %v757
      %v922 = vpop.f32.mrf.mxu0
      %v923 = vadd.f32 %v601, %v922
      %v924 = vpop.f32.mrf.mxu0
      %925 = vmatprep.mubr.f32.mxu0 0.0
      %926 = vmatmul.mubr.f32.gmra.mxu0 %v760
      %v927 = vpop.f32.mrf.mxu0
      %v928 = vadd.f32 %v606, %v927
      %v929 = vpop.f32.mrf.mxu0
      %930 = vmatprep.mubr.f32.mxu0 0.0
      %931 = vmatmul.mubr.f32.gmra.mxu0 %v763
      %v932 = vpop.f32.mrf.mxu0
      %v933 = vadd.f32 %v611, %v932
      %v934 = vpop.f32.mrf.mxu0
      %935 = vmatprep.mubr.f32.mxu0 0.0
      %936 = vmatmul.mubr.f32.gmra.mxu0 %v766
      %v937 = vpop.f32.mrf.mxu0
      %v938 = vadd.f32 %v616, %v937
      %v939 = vpop.f32.mrf.mxu0
      %940 = vmatprep.mubr.f32.mxu0 0.0
      %941 = vmatmul.mubr.f32.gmra.mxu0 %v769
      %v942 = vpop.f32.mrf.mxu0
      %v943 = vadd.f32 %v621, %v942
      %v944 = vpop.f32.mrf.mxu0
      %945 = vmatprep.mubr.f32.mxu0 0.0
      %946 = vmatmul.mubr.f32.gmra.mxu0 %v772
      %v947 = vpop.f32.mrf.mxu0
      %v948 = vadd.f32 %v626, %v947
      %v949 = vpop.f32.mrf.mxu0
      %950 = vmatprep.mubr.f32.mxu0 0.0
      %951 = vmatmul.mubr.f32.gmra.mxu0 %v775
      %v952 = vpop.f32.mrf.mxu0
      %v953 = vadd.f32 %v631, %v952
      %v954 = vpop.f32.mrf.mxu0
      %955 = vmatprep.mubr.f32.mxu0 0.0
      %956 = vmatmul.mubr.f32.gmra.mxu0 %v778
      %v957 = vpop.f32.mrf.mxu0
      %v958 = vadd.f32 %v636, %v957
      %v959 = vpop.f32.mrf.mxu0
      %960 = vmatprep.mubr.f32.mxu0 0.0
      %961 = vmatmul.mubr.f32.gmra.mxu0 %v781
      %v962 = vpop.f32.mrf.mxu0
      %v963 = vadd.f32 %v641, %v962
      %v964 = vpop.f32.mrf.mxu0
      %965 = vmatprep.mubr.f32.mxu0 0.0
      %966 = vmatmul.mubr.f32.gmra.mxu0 %v784
      %v967 = vpop.f32.mrf.mxu0
      %v968 = vadd.f32 %v646, %v967
      %v969 = vpop.f32.mrf.mxu0
      %970 = vmatprep.mubr.f32.mxu0 0.0
      %971 = vmatmul.mubr.f32.gmra.mxu0 %v787
      %v972 = vpop.f32.mrf.mxu0
      %v973 = vadd.f32 %v651, %v972
      %v974 = vpop.f32.mrf.mxu0
      %975 = vmatprep.mubr.f32.mxu0 0.0
      %976 = vmatmul.mubr.f32.gmra.mxu0 %v790
      %v977 = vpop.f32.mrf.mxu0
      %v978 = vadd.f32 %v656, %v977
      %v979 = vpop.f32.mrf.mxu0
      %980 = vmatprep.mubr.f32.mxu0 0.0
      %981 = vmatmul.mubr.f32.gmra.mxu0 %v793
      %v982 = vpop.f32.mrf.mxu0
      %v983 = vadd.f32 %v661, %v982
      %v984 = vpop.f32.mrf.mxu0
      %985 = vmatprep.mubr.f32.mxu0 0.0
      %986 = vmatmul.mubr.f32.gmra.mxu0 %v796
      %v987 = vpop.f32.mrf.mxu0
      %v988 = vadd.f32 %v666, %v987
      %v989 = vpop.f32.mrf.mxu0
      %990 = vmatprep.mubr.f32.mxu0 0.0
      %991 = vmatmul.mubr.f32.gmra.mxu0 %v799
      %v992 = vpop.f32.mrf.mxu0
      %v993 = vadd.f32 %v671, %v992
      %v994 = vpop.f32.mrf.mxu0
      %995 = vmatprep.mubr.f32.mxu0 0.0
      %996 = vmatmul.mubr.f32.gmra.mxu0 %v802
      %v997 = vpop.f32.mrf.mxu0
      %v998 = vadd.f32 %v676, %v997
      %v999 = vpop.f32.mrf.mxu0
      %1000 = vmatprep.mubr.f32.mxu0 0.0
      %1001 = vmatmul.mubr.f32.gmra.mxu0 %v805
      %v1002 = vpop.f32.mrf.mxu0
      %v1003 = vadd.f32 %v681, %v1002
      %v1004 = vpop.f32.mrf.mxu0
      %1005 = vmatprep.mubr.f32.mxu0 0.0
      %1006 = vmatmul.mubr.f32.gmra.mxu0 %v808
      %v1007 = vpop.f32.mrf.mxu0
      %v1008 = vadd.f32 %v686, %v1007
      %v1009 = vpop.f32.mrf.mxu0
      %1010 = vmatprep.mubr.f32.mxu0 0.0
      %1011 = vmatmul.mubr.f32.gmra.mxu0 %v811
      %v1012 = vpop.f32.mrf.mxu0
      %v1013 = vadd.f32 %v691, %v1012
      %v1014 = vpop.f32.mrf.mxu0
      %1015 = vmatprep.mubr.f32.mxu0 0.0
      %1016 = vmatmul.mubr.f32.gmra.mxu0 %v814
      %v1017 = vpop.f32.mrf.mxu0
      %v1018 = vadd.f32 %v696, %v1017
      %v1019 = vpop.f32.mrf.mxu0
      %1020 = vmatprep.mubr.f32.mxu0 0.0
      %1021 = vmatmul.mubr.f32.gmra.mxu0 %v817
      %v1022 = vpop.f32.mrf.mxu0
      %v1023 = vadd.f32 %v701, %v1022
      %v1024 = vpop.f32.mrf.mxu0
      %1025 = vmatprep.mubr.f32.mxu0 0.0
      %1026 = vmatmul.mubr.f32.gmra.mxu0 %v820
      %v1027 = vpop.f32.mrf.mxu0
      %v1028 = vadd.f32 %v706, %v1027
      %v1029 = vpop.f32.mrf.mxu0
      %1030 = vmatprep.mubr.f32.mxu0 0.0
      %1031 = vmatmul.mubr.f32.gmra.mxu0 %v823
      %v1032 = vpop.f32.mrf.mxu0
      %v1033 = vadd.f32 %v711, %v1032
      %v1034 = vpop.f32.mrf.mxu0
      %1035 = vmatprep.mubr.f32.mxu0 0.0
      %1036 = vmatmul.mubr.f32.gmra.mxu0 %v826
      %v1037 = vpop.f32.mrf.mxu0
      %v1038 = vadd.f32 %v716, %v1037
      %v1039 = vpop.f32.mrf.mxu0
      %1040 = vmatprep.mubr.f32.mxu0 0.0
      %1041 = vmatmul.mubr.f32.gmra.mxu0 %v829
      %v1042 = vpop.f32.mrf.mxu0
      %v1043 = vadd.f32 %v721, %v1042
      %v1044 = vpop.f32.mrf.mxu0
      %1045 = vmatprep.mubr.f32.mxu0 0.0
      %1046 = vmatmul.mubr.f32.gmra.mxu0 %v832
      %v1047 = vpop.f32.mrf.mxu0
      %v1048 = vadd.f32 %v726, %v1047
      %v1049 = vpop.f32.mrf.mxu0
      %1050 = vmatprep.mubr.f32.mxu0 0.0
      %1051 = vmatmul.mubr.f32.gmra.mxu0 %v835
      %v1052 = vpop.f32.mrf.mxu0
      %v1053 = vadd.f32 %v731, %v1052
      %v1054 = vpop.f32.mrf.mxu0
      %1055 = vmatprep.mubr.f32.mxu0 0.0
      %1056 = vmatmul.mubr.f32.gmra.mxu0 %v838
      %v1057 = vpop.f32.mrf.mxu0
      %v1058 = vadd.f32 %v736, %v1057
      %v1059 = vpop.f32.mrf.mxu0
      %1060 = vmatprep.mubr.f32.mxu0 0.0
      %1061 = vmatmul.mubr.f32.gmra.mxu0 %v841
      %v1062 = vpop.f32.mrf.mxu0
      %v1063 = vadd.f32 %v741, %v1062
      %v1064 = vpop.f32.mrf.mxu0
      %1065 = vmatprep.mubr.f32.mxu0 0.0
      %1066 = vmatmul.mubr.f32.gmra.mxu0 %v844
      %v1067 = vpop.f32.mrf.mxu0
      %v1068 = vadd.f32 %v746, %v1067
      %v1069 = vpop.f32.mrf.mxu0
      %1070 = vdwg.mxu0
      %v1071 = vld [vmem:[%s4] sm:$0x1]
      %v1073 = vlaneseq
      %v1074 = vshrl.u32 %v1073, 7
      %v1075 = vsub.s32 0, %v1074
      %v1076 = vrot.slane %v1071, %v1075
      %v1078 = vadd.f32 %v913, %v1076
      %v1079 = vadd.f32 %v918, %v1076
      %v1080 = vadd.f32 %v923, %v1076
      %v1081 = vadd.f32 %v928, %v1076
      %v1082 = vadd.f32 %v933, %v1076
      %v1083 = vadd.f32 %v938, %v1076
      %v1084 = vadd.f32 %v943, %v1076
      %v1085 = vadd.f32 %v948, %v1076
      %v1086 = vadd.f32 %v953, %v1076
      %v1087 = vadd.f32 %v958, %v1076
      %v1088 = vadd.f32 %v963, %v1076
      %v1089 = vadd.f32 %v968, %v1076
      %v1090 = vadd.f32 %v973, %v1076
      %v1091 = vadd.f32 %v978, %v1076
      %v1092 = vadd.f32 %v983, %v1076
      %v1093 = vadd.f32 %v988, %v1076
      %v1094 = vadd.f32 %v993, %v1076
      %v1095 = vadd.f32 %v998, %v1076
      %v1096 = vadd.f32 %v1003, %v1076
      %v1097 = vadd.f32 %v1008, %v1076
      %v1098 = vadd.f32 %v1013, %v1076
      %v1099 = vadd.f32 %v1018, %v1076
      %v1100 = vadd.f32 %v1023, %v1076
      %v1101 = vadd.f32 %v1028, %v1076
      %v1102 = vadd.f32 %v1033, %v1076
      %v1103 = vadd.f32 %v1038, %v1076
      %v1104 = vadd.f32 %v1043, %v1076
      %v1105 = vadd.f32 %v1048, %v1076
      %v1106 = vadd.f32 %v1053, %v1076
      %v1107 = vadd.f32 %v1058, %v1076
      %v1108 = vadd.f32 %v1063, %v1076
      %v1109 = vadd.f32 %v1068, %v1076
      %v1110 = vmax.f32 %v1078, 0.0
      %v1111 = vmax.f32 %v1079, 0.0
      %v1112 = vmax.f32 %v1080, 0.0
      %v1113 = vmax.f32 %v1081, 0.0
      %v1114 = vmax.f32 %v1082, 0.0
      %v1115 = vmax.f32 %v1083, 0.0
      %v1116 = vmax.f32 %v1084, 0.0
      %v1117 = vmax.f32 %v1085, 0.0
      %v1118 = vmax.f32 %v1086, 0.0
      %v1119 = vmax.f32 %v1087, 0.0
      %v1120 = vmax.f32 %v1088, 0.0
      %v1121 = vmax.f32 %v1089, 0.0
      %v1122 = vmax.f32 %v1090, 0.0
      %v1123 = vmax.f32 %v1091, 0.0
      %v1124 = vmax.f32 %v1092, 0.0
      %v1125 = vmax.f32 %v1093, 0.0
      %v1126 = vmax.f32 %v1094, 0.0
      %v1127 = vmax.f32 %v1095, 0.0
      %v1128 = vmax.f32 %v1096, 0.0
      %v1129 = vmax.f32 %v1097, 0.0
      %v1130 = vmax.f32 %v1098, 0.0
      %v1131 = vmax.f32 %v1099, 0.0
      %v1132 = vmax.f32 %v1100, 0.0
      %v1133 = vmax.f32 %v1101, 0.0
      %v1134 = vmax.f32 %v1102, 0.0
      %v1135 = vmax.f32 %v1103, 0.0
      %v1136 = vmax.f32 %v1104, 0.0
      %v1137 = vmax.f32 %v1105, 0.0
      %v1138 = vmax.f32 %v1106, 0.0
      %v1139 = vmax.f32 %v1107, 0.0
      %v1140 = vmax.f32 %v1108, 0.0
      %v1141 = vmax.f32 %v1109, 0.0
      %vm1142 = vcmask 64512
      %1143 = vst.msk [vmem:[%s307] sm:$0xff] %vm1142, %v1110
      %1144 = vst.msk [vmem:[%s307 + $0x8] sm:$0xff] %vm1142, %v1111
      %1145 = vst.msk [vmem:[%s307 + $0x10] sm:$0xff] %vm1142, %v1112
      %1146 = vst.msk [vmem:[%s307 + $0x18] sm:$0xff] %vm1142, %v1113
      %1147 = vst.msk [vmem:[%s307 + $0x20] sm:$0xff] %vm1142, %v1114
      %1148 = vst.msk [vmem:[%s307 + $0x28] sm:$0xff] %vm1142, %v1115
      %1149 = vst.msk [vmem:[%s307 + $0x30] sm:$0xff] %vm1142, %v1116
      %1150 = vst.msk [vmem:[%s307 + $0x38] sm:$0xff] %vm1142, %v1117
      %1151 = vst.msk [vmem:[%s307 + $0x40] sm:$0xff] %vm1142, %v1118
      %1152 = vst.msk [vmem:[%s307 + $0x48] sm:$0xff] %vm1142, %v1119
      %1153 = vst.msk [vmem:[%s307 + $0x50] sm:$0xff] %vm1142, %v1120
      %1154 = vst.msk [vmem:[%s307 + $0x58] sm:$0xff] %vm1142, %v1121
      %1155 = vst.msk [vmem:[%s307 + $0x60] sm:$0xff] %vm1142, %v1122
      %1156 = vst.msk [vmem:[%s307 + $0x68] sm:$0xff] %vm1142, %v1123
      %1157 = vst.msk [vmem:[%s307 + $0x70] sm:$0xff] %vm1142, %v1124
      %1158 = vst.msk [vmem:[%s307 + $0x78] sm:$0xff] %vm1142, %v1125
      %1159 = vst.msk [vmem:[%s307 + $0x80] sm:$0xff] %vm1142, %v1126
      %1160 = vst.msk [vmem:[%s307 + $0x88] sm:$0xff] %vm1142, %v1127
      %1161 = vst.msk [vmem:[%s307 + $0x90] sm:$0xff] %vm1142, %v1128
      %1162 = vst.msk [vmem:[%s307 + $0x98] sm:$0xff] %vm1142, %v1129
      %1163 = vst.msk [vmem:[%s307 + $0xa0] sm:$0xff] %vm1142, %v1130
      %1164 = vst.msk [vmem:[%s307 + $0xa8] sm:$0xff] %vm1142, %v1131
      %1165 = vst.msk [vmem:[%s307 + $0xb0] sm:$0xff] %vm1142, %v1132
      %1166 = vst.msk [vmem:[%s307 + $0xb8] sm:$0xff] %vm1142, %v1133
      %1167 = vst.msk [vmem:[%s307 + $0xc0] sm:$0xff] %vm1142, %v1134
      %1168 = vst.msk [vmem:[%s307 + $0xc8] sm:$0xff] %vm1142, %v1135
      %1169 = vst.msk [vmem:[%s307 + $0xd0] sm:$0xff] %vm1142, %v1136
      %1170 = vst.msk [vmem:[%s307 + $0xd8] sm:$0xff] %vm1142, %v1137
      %1171 = vst.msk [vmem:[%s307 + $0xe0] sm:$0xff] %vm1142, %v1138
      %1172 = vst.msk [vmem:[%s307 + $0xe8] sm:$0xff] %vm1142, %v1139
      %1173 = vst.msk [vmem:[%s307 + $0xf0] sm:$0xff] %vm1142, %v1140
      %1174 = vst.msk [vmem:[%s307 + $0xf8] sm:$0xff] %vm1142, %v1141
      %s1175 = smul.u32 32, %s21
      %p1176 = scmp.lt.s32.totalorder %s20, 1
      %s1177 = scalar_select %p1176, %s20, 1
      %p1178 = scmp.lt.s32.totalorder %s1175, 31
      %s1179 = scalar_select %p1178, %s1175, 31
      %s1180 = smul.addr %s1177, 32
      %s1181 = sadd.s32 %s1179, %s1180
      %s1182 = smul.addr %s1181, 8
      %s1183 = scalar_lea.vmem %s5, %s1182
      // Predicated region
      $region41: #{spp_forward.5} parent=39 // pred_check
        %p1184 = pneg %p170
      $region42: #{spp_forward.5} parent=39 // pred_check_branch
        %1186 = sbr.rel (%p1184) target = $region44
      $region43: #{spp_forward.5} parent=39 // pred_region
        %s1187 = smul.u32 32, %s21
      $region44: #{spp_forward.5} parent=39 // pred_fallthru
        _
    $region40: #{spp_forward.5} parent=5 // pred_fallthru
      _
    %p1188 = scmp.le.s32.totalorder 2, %s11
    // Predicated region
    $region45: #{spp_forward.5} parent=5 // pred_check
      %p1189 = pneg %p1188
    $region46: #{spp_forward.5} parent=5 // pred_check_branch
      %1191 = sbr.rel (%p1189) target = $region48
    $region47: #{spp_forward.5} parent=5 // pred_region
      %s1192 = ssub.s32 %s11, 2
      // Predicated region
      $region49: #{spp_forward.5} parent=47 // pred_check
        %p1193 = pneg %p176
      $region50: #{spp_forward.5} parent=47 // pred_check_branch
        %1195 = sbr.rel (%p1193) target = $region52
      $region51: #{spp_forward.5} parent=47 // pred_region
        %s1196 = smul.u32 32, %s23
        %p1197 = scmp.lt.s32.totalorder %s22, 1
        %s1198 = scalar_select %p1197, %s22, 1
        %p1199 = scmp.lt.s32.totalorder %s1196, 31
        %s1200 = scalar_select %p1199, %s1196, 31
        %s1201 = smul.addr %s1198, 32
        %s1202 = sadd.s32 %s1200, %s1201
        %s1203 = smul.addr %s1202, 8
        %s1204 = scalar_lea.vmem %s5, %s1203
      $region52: #{spp_forward.5} parent=47 // pred_fallthru
        _
    $region48: #{spp_forward.5} parent=5 // pred_fallthru
      _
  $region6: #{spp_forward.5} parent=0 // loop_footer
    %s15 = sadd.s32 1, %s11
  $region7: #{spp_forward.5} parent=0 // loop_footer_branch
    %10 = sbr.rel target = $region3
  $region8: #{spp_forward.5} parent=0 // loop_exit
    _

</llo_original>
